<compile_context>
chip_gen: v7x
topology: tpu7x:2x2x1
jax: 0.10.0
libtpu: 0.0.40
codegen_flags: <defaults>
</compile_context>

<pallas_src>
import jax
import jax.numpy as jnp
import numpy as np
from jax.experimental import pallas as pl
from jax.experimental.pallas import tpu as pltpu

LANE = 128
_VMEM = pl.BlockSpec(memory_space=pltpu.MemorySpace.VMEM)
_VMEM_LIMIT = 32 * 1024 * 1024


def _round_up(n, m=LANE):
    return ((n + m - 1) // m) * m


# ------------------------------ Pallas kernels ------------------------------

def _make_block_kernel(N, OH, OW, K, eps=1e-5):
    """Fused ConvTranspose2d (bias-free) + BatchNorm2d(train mode) + ReLU."""
    P = OH * OW

    def kernel(xp_ref, w_ref, gamma_ref, beta_ref, out_ref, acc_ref):
        # xp_ref : (N, HP, WP, Ci)  bf16  zero-dilated + padded input
        # w_ref  : (K*K, Ci, Co)    bf16  spatially flipped, channel-padded
        # gamma_ref, beta_ref : (1, Co) f32
        # out_ref: (N, OH, OW, Co)  bf16
        # acc_ref: (N*P, Co)        f32   VMEM accumulator
        xv = xp_ref[...].astype(jnp.float32)     # slice/relayout in f32
        ci = xv.shape[-1]
        acc_ref[...] = jnp.zeros_like(acc_ref)
        for kh in range(K):                      # K*K shifted MXU matmuls
            for kw in range(K):
                patch = xv[:, kh:kh + OH, kw:kw + OW, :].reshape(N * P, ci)
                acc_ref[...] += jnp.dot(patch.astype(jnp.bfloat16),
                                        w_ref[kh * K + kw],
                                        preferred_element_type=jnp.float32)
        # BatchNorm (batch stats, biased variance) + ReLU epilogue in f32.
        x = acc_ref[...]                                         # (N*P, Co)
        inv_cnt = 1.0 / float(N * P)
        mean = jnp.sum(x, axis=0, keepdims=True) * inv_cnt
        var = jnp.sum(x * x, axis=0, keepdims=True) * inv_cnt - mean * mean
        scale = jax.lax.rsqrt(var + eps) * gamma_ref[...]
        shift = beta_ref[...] - mean * scale
        y = jnp.maximum(x * scale + shift, 0.0)
        out_ref[...] = y.reshape(N, OH, OW, y.shape[-1]).astype(out_ref.dtype)

    return kernel


def _make_final_kernel(OH, OW, K):
    """Fused ConvTranspose2d + bias + tanh for one batch element (grid over N)."""
    P = OH * OW

    def kernel(xp_ref, w_ref, b_ref, out_ref, acc_ref):
        xv = xp_ref[0].astype(jnp.float32)
        ci = xv.shape[-1]
        acc_ref[...] = jnp.zeros_like(acc_ref)
        for kh in range(K):
            for kw in range(K):
                patch = xv[kh:kh + OH, kw:kw + OW, :].reshape(P, ci)
                acc_ref[...] += jnp.dot(patch.astype(jnp.bfloat16),
                                        w_ref[kh * K + kw],
                                        preferred_element_type=jnp.float32)
        y = jnp.tanh(acc_ref[...] + b_ref[...])                  # f32 epilogue
        out_ref[0] = y.reshape(OH, OW, y.shape[-1]).astype(out_ref.dtype)

    return kernel


# ------------------------------ layer wrappers -------------------------------

def _dilate_pad(x, stride, K, padding):
    """Zero-dilate by `stride` and pad so that a stride-1 VALID conv with the
    flipped kernel equals the transposed convolution (pure data movement)."""
    N, H, W, C = x.shape
    if stride > 1:
        HD, WD = (H - 1) * stride + 1, (W - 1) * stride + 1
        xd = jnp.zeros((N, HD, WD, C), x.dtype).at[:, ::stride, ::stride, :].set(x)
    else:
        xd = x
    p = K - 1 - padding
    return jnp.pad(xd, ((0, 0), (p, p), (p, p), (0, 0)))


def _prep_weight(w_pt, cin_p, cout_p):
    """PyTorch ConvTranspose2d weight (Cin, Cout, K, K) -> spatially flipped,
    channel-padded (K*K, cin_p, cout_p) bf16 matmul operand."""
    Cin, Cout, K, _ = w_pt.shape
    w = jnp.transpose(w_pt, (2, 3, 0, 1))[::-1, ::-1, :, :]        # (K,K,Cin,Cout)
    w = jnp.pad(w, ((0, 0), (0, 0), (0, cin_p - Cin), (0, cout_p - Cout)))
    return w.reshape(K * K, cin_p, cout_p).astype(jnp.bfloat16)


def deconv_bn_relu(x, w_pt, gamma, beta, stride, padding):
    N, H, W, Cip = x.shape
    Cin, Cout, K, _ = w_pt.shape
    Cop = _round_up(Cout)
    OH = (H - 1) * stride - 2 * padding + K
    OW = (W - 1) * stride - 2 * padding + K
    xp = _dilate_pad(x, stride, K, padding)
    w = _prep_weight(w_pt, Cip, Cop)
    g = jnp.pad(gamma.astype(jnp.float32), (0, Cop - Cout),
                constant_values=1.0).reshape(1, Cop)
    b = jnp.pad(beta.astype(jnp.float32), (0, Cop - Cout)).reshape(1, Cop)
    return pl.pallas_call(
        _make_block_kernel(N, OH, OW, K),
        in_specs=[_VMEM, _VMEM, _VMEM, _VMEM],
        out_specs=_VMEM,
        out_shape=jax.ShapeDtypeStruct((N, OH, OW, Cop), jnp.bfloat16),
        scratch_shapes=[pltpu.VMEM((N * OH * OW, Cop), jnp.float32)],
        compiler_params=pltpu.CompilerParams(vmem_limit_bytes=_VMEM_LIMIT),
    )(xp, w, g, b)


def deconv_bias_tanh(x, w_pt, bias, stride, padding):
    N, H, W, Cip = x.shape
    Cin, Cout, K, _ = w_pt.shape
    Cop = _round_up(Cout)
    OH = (H - 1) * stride - 2 * padding + K
    OW = (W - 1) * stride - 2 * padding + K
    xp = _dilate_pad(x, stride, K, padding)
    HP, WP = xp.shape[1], xp.shape[2]
    w = _prep_weight(w_pt, Cip, Cop)
    b = jnp.pad(bias.astype(jnp.float32), (0, Cop - Cout)).reshape(1, Cop)
    return pl.pallas_call(
        _make_final_kernel(OH, OW, K),
        grid=(N,),
        in_specs=[
            pl.BlockSpec((1, HP, WP, Cip), lambda n: (n, 0, 0, 0)),
            pl.BlockSpec((K * K, Cip, Cop), lambda n: (0, 0, 0)),
            pl.BlockSpec((1, Cop), lambda n: (0, 0)),
        ],
        out_specs=pl.BlockSpec((1, OH, OW, Cop), lambda n: (n, 0, 0, 0)),
        out_shape=jax.ShapeDtypeStruct((N, OH, OW, Cop), jnp.float32),
        scratch_shapes=[pltpu.VMEM((OH * OW, Cop), jnp.float32)],
        compiler_params=pltpu.CompilerParams(
            dimension_semantics=("parallel",),
            vmem_limit_bytes=_VMEM_LIMIT),
    )(xp, w, b)


def generator_forward(x_nchw, params):
    """Forward pass equivalent to Generator.forward (NCHW in, NCHW out)."""
    x = jnp.transpose(x_nchw, (0, 2, 3, 1)).astype(jnp.float32)   # -> NHWC
    cp = _round_up(x.shape[-1])
    x = jnp.pad(x, ((0, 0), (0, 0), (0, 0), (0, cp - x.shape[-1])))
    x = x.astype(jnp.bfloat16)                                    # lane-padded bf16
    for blk in params["blocks"]:
        x = deconv_bn_relu(x, blk["w"], blk["gamma"], blk["beta"],
                           blk["stride"], blk["padding"])
    last = params["last"]
    y = deconv_bias_tanh(x, last["w"], last["b"], last["stride"], last["padding"])
    c_img = last["w"].shape[1]
    return jnp.transpose(y[..., :c_img], (0, 3, 1, 2))            # -> NCHW


# ------------------------------ params ---------------------------------------

def init_generator_params(key, channels_noise, channels_img, features_g):
    specs = [
        (channels_noise,  features_g * 16, 4, 1, 0),
        (features_g * 16, features_g * 8,  4, 2, 1),
        (features_g * 8,  features_g * 4,  4, 2, 1),
        (features_g * 4,  features_g * 2,  4, 2, 1),
    ]
    blocks = []
    for (cin, cout, k, s, p) in specs:
        key, wk = jax.random.split(key)
        blocks.append(dict(
            w=0.02 * jax.random.normal(wk, (cin, cout, k, k), jnp.float32),  # torch layout
            gamma=jnp.ones((cout,), jnp.float32),   # BatchNorm2d default init
            beta=jnp.zeros((cout,), jnp.float32),
            stride=s, padding=p))
    key, wk, bk = jax.random.split(key, 3)
    last = dict(
        w=0.02 * jax.random.normal(wk, (features_g * 2, channels_img, 4, 4), jnp.float32),
        b=0.02 * jax.random.normal(bk, (channels_img,), jnp.float32),
        stride=2, padding=1)
    return dict(blocks=blocks, last=last)


# ------------------------------ pure-JAX reference ---------------------------
# Mirrors the kernel's precision policy (bf16 matmul operands / bf16 activation
# storage, f32 accumulation and f32 BN/tanh epilogue); structure is identical to
# the PyTorch module.

def _conv_transpose_ref(x, w_pt, stride, padding):
    K = w_pt.shape[2]
    w_hwio = jnp.transpose(w_pt, (2, 3, 0, 1))[::-1, ::-1, :, :]
    return jax.lax.conv_general_dilated(
        x.astype(jnp.bfloat16), w_hwio.astype(jnp.bfloat16),
        window_strides=(1, 1),
        padding=[(K - 1 - padding, K - 1 - padding)] * 2,
        lhs_dilation=(stride, stride),
        dimension_numbers=("NHWC", "HWIO", "NHWC"),
        preferred_element_type=jnp.float32)


def generator_forward_ref(x_nchw, params):
    x = jnp.transpose(x_nchw, (0, 2, 3, 1)).astype(jnp.float32)
    for blk in params["blocks"]:
        x = _conv_transpose_ref(x, blk["w"], blk["stride"], blk["padding"])  # f32
        mean = jnp.mean(x, axis=(0, 1, 2), keepdims=True)
        var = jnp.mean((x - mean) ** 2, axis=(0, 1, 2), keepdims=True)
        x = (x - mean) * jax.lax.rsqrt(var + 1e-5) * blk["gamma"] + blk["beta"]
        x = jnp.maximum(x, 0.0)
        x = x.astype(jnp.bfloat16)        # bf16 activation storage, like the kernel
    last = params["last"]
    x = _conv_transpose_ref(x, last["w"], last["stride"], last["padding"])
    x = jnp.tanh(x + last["b"])
    return jnp.transpose(x, (0, 3, 1, 2))


# ------------------------------ main -----------------------------------------

if __name__ == "__main__":
    # small config consistent with the module: channels_noise=32, features_g=8
    channels_noise, channels_img, features_g = 32, 3, 8
    batch = 2

    key = jax.random.PRNGKey(0)
    key, pkey, xkey = jax.random.split(key, 3)
    params = init_generator_params(pkey, channels_noise, channels_img, features_g)
    x = jax.random.normal(xkey, (batch, channels_noise, 1, 1), jnp.float32)  # NCHW noise

    out = jax.block_until_ready(generator_forward(x, params))
    assert out.shape == (batch, channels_img, 64, 64), out.shape

    ref = jax.block_until_ready(generator_forward_ref(x, params))
    np.testing.assert_allclose(np.asarray(out), np.asarray(ref), rtol=5e-3, atol=5e-3)

    print("KERNEL_OK")
</pallas_src>

<mosaic_0001>
module attributes {stable_mosaic.version = 11 : i64} {
  func.func @kernel(%arg0: memref<2x7x7x128xbf16, #tpu.memory_space<vmem>>, %arg1: memref<16x128x128xbf16, #tpu.memory_space<vmem>>, %arg2: memref<1x128xf32, #tpu.memory_space<vmem>>, %arg3: memref<1x128xf32, #tpu.memory_space<vmem>>, %arg4: memref<2x4x4x128xbf16, #tpu.memory_space<vmem>>, %arg5: memref<32x128xf32, #tpu.memory_space<vmem>>) attributes {dimension_semantics = [], scalar_prefetch = 0 : i64, scratch_operands = 1 : i64, tpu.core_type = #tpu.core_type<tc>} {
    %c0 = arith.constant 0 : index
    %c0_0 = arith.constant 0 : index
    %c0_1 = arith.constant 0 : index
    %c0_2 = arith.constant 0 : index
    %0 = vector.load %arg0[%c0, %c0_0, %c0_1, %c0_2] : memref<2x7x7x128xbf16, #tpu.memory_space<vmem>>, vector<2x7x7x128xbf16>
    %1 = arith.extf %0 : vector<2x7x7x128xbf16> to vector<2x7x7x128xf32>
    %cst = arith.constant 0.000000e+00 : f32
    %2 = vector.broadcast %cst : f32 to vector<32x128xf32>
    %c0_3 = arith.constant 0 : index
    %c0_4 = arith.constant 0 : index
    %3 = vector.load %arg5[%c0_3, %c0_4] : memref<32x128xf32, #tpu.memory_space<vmem>>, vector<32x128xf32>
    tpu.vector_store %arg5[%c0_3, %c0_4], %2 {strides = array<i32>} : memref<32x128xf32, #tpu.memory_space<vmem>>, vector<32x128xf32>,
    %4 = vector.extract_strided_slice %1 {offsets = [0, 0, 0, 0], sizes = [2, 4, 4, 128], strides = [1, 1, 1, 1]} : vector<2x7x7x128xf32> to vector<2x4x4x128xf32>
    %5 = vector.shape_cast %4 : vector<2x4x4x128xf32> to vector<32x128xf32>
    %c0_5 = arith.constant 0 : index
    %c0_6 = arith.constant 0 : index
    %6 = vector.load %arg5[%c0_5, %c0_6] : memref<32x128xf32, #tpu.memory_space<vmem>>, vector<32x128xf32>
    %7 = arith.truncf %5 : vector<32x128xf32> to vector<32x128xbf16>
    %c0_7 = arith.constant 0 : index
    %c0_8 = arith.constant 0 : index
    %c0_9 = arith.constant 0 : index
    %8 = vector.load %arg1[%c0_7, %c0_8, %c0_9] : memref<16x128x128xbf16, #tpu.memory_space<vmem>>, vector<1x128x128xbf16>
    %9 = vector.shape_cast %8 : vector<1x128x128xbf16> to vector<128x128xbf16>
    %cst_10 = arith.constant dense<0.000000e+00> : vector<32x128xf32>
    %10 = tpu.matmul %7, %9, %cst_10 {dimension_numbers = #tpu.dot_dimension_numbers<[1], [0], [0], [1], [0, 0, 1, 1], [], []>} : vector<32x128xbf16>, vector<128x128xbf16>, vector<32x128xf32> -> vector<32x128xf32>
    %11 = arith.addf %6, %10 : vector<32x128xf32>
    %c0_11 = arith.constant 0 : index
    %c0_12 = arith.constant 0 : index
    %12 = vector.load %arg5[%c0_11, %c0_12] : memref<32x128xf32, #tpu.memory_space<vmem>>, vector<32x128xf32>
    tpu.vector_store %arg5[%c0_11, %c0_12], %11 {strides = array<i32>} : memref<32x128xf32, #tpu.memory_space<vmem>>, vector<32x128xf32>,
    %13 = vector.extract_strided_slice %1 {offsets = [0, 0, 1, 0], sizes = [2, 4, 4, 128], strides = [1, 1, 1, 1]} : vector<2x7x7x128xf32> to vector<2x4x4x128xf32>
    %14 = vector.shape_cast %13 : vector<2x4x4x128xf32> to vector<32x128xf32>
    %c0_13 = arith.constant 0 : index
    %c0_14 = arith.constant 0 : index
    %15 = vector.load %arg5[%c0_13, %c0_14] : memref<32x128xf32, #tpu.memory_space<vmem>>, vector<32x128xf32>
    %16 = arith.truncf %14 : vector<32x128xf32> to vector<32x128xbf16>
    %c1 = arith.constant 1 : index
    %c0_15 = arith.constant 0 : index
    %c0_16 = arith.constant 0 : index
    %17 = vector.load %arg1[%c1, %c0_15, %c0_16] : memref<16x128x128xbf16, #tpu.memory_space<vmem>>, vector<1x128x128xbf16>
    %18 = vector.shape_cast %17 : vector<1x128x128xbf16> to vector<128x128xbf16>
    %cst_17 = arith.constant dense<0.000000e+00> : vector<32x128xf32>
    %19 = tpu.matmul %16, %18, %cst_17 {dimension_numbers = #tpu.dot_dimension_numbers<[1], [0], [0], [1], [0, 0, 1, 1], [], []>} : vector<32x128xbf16>, vector<128x128xbf16>, vector<32x128xf32> -> vector<32x128xf32>
    %20 = arith.addf %15, %19 : vector<32x128xf32>
    %c0_18 = arith.constant 0 : index
    %c0_19 = arith.constant 0 : index
    %21 = vector.load %arg5[%c0_18, %c0_19] : memref<32x128xf32, #tpu.memory_space<vmem>>, vector<32x128xf32>
    tpu.vector_store %arg5[%c0_18, %c0_19], %20 {strides = array<i32>} : memref<32x128xf32, #tpu.memory_space<vmem>>, vector<32x128xf32>,
    %22 = vector.extract_strided_slice %1 {offsets = [0, 0, 2, 0], sizes = [2, 4, 4, 128], strides = [1, 1, 1, 1]} : vector<2x7x7x128xf32> to vector<2x4x4x128xf32>
    %23 = vector.shape_cast %22 : vector<2x4x4x128xf32> to vector<32x128xf32>
    %c0_20 = arith.constant 0 : index
    %c0_21 = arith.constant 0 : index
    %24 = vector.load %arg5[%c0_20, %c0_21] : memref<32x128xf32, #tpu.memory_space<vmem>>, vector<32x128xf32>
    %25 = arith.truncf %23 : vector<32x128xf32> to vector<32x128xbf16>
    %c2 = arith.constant 2 : index
    %c0_22 = arith.constant 0 : index
    %c0_23 = arith.constant 0 : index
    %26 = vector.load %arg1[%c2, %c0_22, %c0_23] : memref<16x128x128xbf16, #tpu.memory_space<vmem>>, vector<1x128x128xbf16>
    %27 = vector.shape_cast %26 : vector<1x128x128xbf16> to vector<128x128xbf16>
    %cst_24 = arith.constant dense<0.000000e+00> : vector<32x128xf32>
    %28 = tpu.matmul %25, %27, %cst_24 {dimension_numbers = #tpu.dot_dimension_numbers<[1], [0], [0], [1], [0, 0, 1, 1], [], []>} : vector<32x128xbf16>, vector<128x128xbf16>, vector<32x128xf32> -> vector<32x128xf32>
    %29 = arith.addf %24, %28 : vector<32x128xf32>
    %c0_25 = arith.constant 0 : index
    %c0_26 = arith.constant 0 : index
    %30 = vector.load %arg5[%c0_25, %c0_26] : memref<32x128xf32, #tpu.memory_space<vmem>>, vector<32x128xf32>
    tpu.vector_store %arg5[%c0_25, %c0_26], %29 {strides = array<i32>} : memref<32x128xf32, #tpu.memory_space<vmem>>, vector<32x128xf32>,
    %31 = vector.extract_strided_slice %1 {offsets = [0, 0, 3, 0], sizes = [2, 4, 4, 128], strides = [1, 1, 1, 1]} : vector<2x7x7x128xf32> to vector<2x4x4x128xf32>
    %32 = vector.shape_cast %31 : vector<2x4x4x128xf32> to vector<32x128xf32>
    %c0_27 = arith.constant 0 : index
    %c0_28 = arith.constant 0 : index
    %33 = vector.load %arg5[%c0_27, %c0_28] : memref<32x128xf32, #tpu.memory_space<vmem>>, vector<32x128xf32>
    %34 = arith.truncf %32 : vector<32x128xf32> to vector<32x128xbf16>
    %c3 = arith.constant 3 : index
    %c0_29 = arith.constant 0 : index
    %c0_30 = arith.constant 0 : index
    %35 = vector.load %arg1[%c3, %c0_29, %c0_30] : memref<16x128x128xbf16, #tpu.memory_space<vmem>>, vector<1x128x128xbf16>
    %36 = vector.shape_cast %35 : vector<1x128x128xbf16> to vector<128x128xbf16>
    %cst_31 = arith.constant dense<0.000000e+00> : vector<32x128xf32>
    %37 = tpu.matmul %34, %36, %cst_31 {dimension_numbers = #tpu.dot_dimension_numbers<[1], [0], [0], [1], [0, 0, 1, 1], [], []>} : vector<32x128xbf16>, vector<128x128xbf16>, vector<32x128xf32> -> vector<32x128xf32>
    %38 = arith.addf %33, %37 : vector<32x128xf32>
    %c0_32 = arith.constant 0 : index
    %c0_33 = arith.constant 0 : index
    %39 = vector.load %arg5[%c0_32, %c0_33] : memref<32x128xf32, #tpu.memory_space<vmem>>, vector<32x128xf32>
    tpu.vector_store %arg5[%c0_32, %c0_33], %38 {strides = array<i32>} : memref<32x128xf32, #tpu.memory_space<vmem>>, vector<32x128xf32>,
    %40 = vector.extract_strided_slice %1 {offsets = [0, 1, 0, 0], sizes = [2, 4, 4, 128], strides = [1, 1, 1, 1]} : vector<2x7x7x128xf32> to vector<2x4x4x128xf32>
    %41 = vector.shape_cast %40 : vector<2x4x4x128xf32> to vector<32x128xf32>
    %c0_34 = arith.constant 0 : index
    %c0_35 = arith.constant 0 : index
    %42 = vector.load %arg5[%c0_34, %c0_35] : memref<32x128xf32, #tpu.memory_space<vmem>>, vector<32x128xf32>
    %43 = arith.truncf %41 : vector<32x128xf32> to vector<32x128xbf16>
    %c4 = arith.constant 4 : index
    %c0_36 = arith.constant 0 : index
    %c0_37 = arith.constant 0 : index
    %44 = vector.load %arg1[%c4, %c0_36, %c0_37] : memref<16x128x128xbf16, #tpu.memory_space<vmem>>, vector<1x128x128xbf16>
    %45 = vector.shape_cast %44 : vector<1x128x128xbf16> to vector<128x128xbf16>
    %cst_38 = arith.constant dense<0.000000e+00> : vector<32x128xf32>
    %46 = tpu.matmul %43, %45, %cst_38 {dimension_numbers = #tpu.dot_dimension_numbers<[1], [0], [0], [1], [0, 0, 1, 1], [], []>} : vector<32x128xbf16>, vector<128x128xbf16>, vector<32x128xf32> -> vector<32x128xf32>
    %47 = arith.addf %42, %46 : vector<32x128xf32>
    %c0_39 = arith.constant 0 : index
    %c0_40 = arith.constant 0 : index
    %48 = vector.load %arg5[%c0_39, %c0_40] : memref<32x128xf32, #tpu.memory_space<vmem>>, vector<32x128xf32>
    tpu.vector_store %arg5[%c0_39, %c0_40], %47 {strides = array<i32>} : memref<32x128xf32, #tpu.memory_space<vmem>>, vector<32x128xf32>,
    %49 = vector.extract_strided_slice %1 {offsets = [0, 1, 1, 0], sizes = [2, 4, 4, 128], strides = [1, 1, 1, 1]} : vector<2x7x7x128xf32> to vector<2x4x4x128xf32>
    %50 = vector.shape_cast %49 : vector<2x4x4x128xf32> to vector<32x128xf32>
    %c0_41 = arith.constant 0 : index
    %c0_42 = arith.constant 0 : index
    %51 = vector.load %arg5[%c0_41, %c0_42] : memref<32x128xf32, #tpu.memory_space<vmem>>, vector<32x128xf32>
    %52 = arith.truncf %50 : vector<32x128xf32> to vector<32x128xbf16>
    %c5 = arith.constant 5 : index
    %c0_43 = arith.constant 0 : index
    %c0_44 = arith.constant 0 : index
    %53 = vector.load %arg1[%c5, %c0_43, %c0_44] : memref<16x128x128xbf16, #tpu.memory_space<vmem>>, vector<1x128x128xbf16>
    %54 = vector.shape_cast %53 : vector<1x128x128xbf16> to vector<128x128xbf16>
    %cst_45 = arith.constant dense<0.000000e+00> : vector<32x128xf32>
    %55 = tpu.matmul %52, %54, %cst_45 {dimension_numbers = #tpu.dot_dimension_numbers<[1], [0], [0], [1], [0, 0, 1, 1], [], []>} : vector<32x128xbf16>, vector<128x128xbf16>, vector<32x128xf32> -> vector<32x128xf32>
    %56 = arith.addf %51, %55 : vector<32x128xf32>
    %c0_46 = arith.constant 0 : index
    %c0_47 = arith.constant 0 : index
    %57 = vector.load %arg5[%c0_46, %c0_47] : memref<32x128xf32, #tpu.memory_space<vmem>>, vector<32x128xf32>
    tpu.vector_store %arg5[%c0_46, %c0_47], %56 {strides = array<i32>} : memref<32x128xf32, #tpu.memory_space<vmem>>, vector<32x128xf32>,
    %58 = vector.extract_strided_slice %1 {offsets = [0, 1, 2, 0], sizes = [2, 4, 4, 128], strides = [1, 1, 1, 1]} : vector<2x7x7x128xf32> to vector<2x4x4x128xf32>
    %59 = vector.shape_cast %58 : vector<2x4x4x128xf32> to vector<32x128xf32>
    %c0_48 = arith.constant 0 : index
    %c0_49 = arith.constant 0 : index
    %60 = vector.load %arg5[%c0_48, %c0_49] : memref<32x128xf32, #tpu.memory_space<vmem>>, vector<32x128xf32>
    %61 = arith.truncf %59 : vector<32x128xf32> to vector<32x128xbf16>
    %c6 = arith.constant 6 : index
    %c0_50 = arith.constant 0 : index
    %c0_51 = arith.constant 0 : index
    %62 = vector.load %arg1[%c6, %c0_50, %c0_51] : memref<16x128x128xbf16, #tpu.memory_space<vmem>>, vector<1x128x128xbf16>
    %63 = vector.shape_cast %62 : vector<1x128x128xbf16> to vector<128x128xbf16>
    %cst_52 = arith.constant dense<0.000000e+00> : vector<32x128xf32>
    %64 = tpu.matmul %61, %63, %cst_52 {dimension_numbers = #tpu.dot_dimension_numbers<[1], [0], [0], [1], [0, 0, 1, 1], [], []>} : vector<32x128xbf16>, vector<128x128xbf16>, vector<32x128xf32> -> vector<32x128xf32>
    %65 = arith.addf %60, %64 : vector<32x128xf32>
    %c0_53 = arith.constant 0 : index
    %c0_54 = arith.constant 0 : index
    %66 = vector.load %arg5[%c0_53, %c0_54] : memref<32x128xf32, #tpu.memory_space<vmem>>, vector<32x128xf32>
    tpu.vector_store %arg5[%c0_53, %c0_54], %65 {strides = array<i32>} : memref<32x128xf32, #tpu.memory_space<vmem>>, vector<32x128xf32>,
    %67 = vector.extract_strided_slice %1 {offsets = [0, 1, 3, 0], sizes = [2, 4, 4, 128], strides = [1, 1, 1, 1]} : vector<2x7x7x128xf32> to vector<2x4x4x128xf32>
    %68 = vector.shape_cast %67 : vector<2x4x4x128xf32> to vector<32x128xf32>
    %c0_55 = arith.constant 0 : index
    %c0_56 = arith.constant 0 : index
    %69 = vector.load %arg5[%c0_55, %c0_56] : memref<32x128xf32, #tpu.memory_space<vmem>>, vector<32x128xf32>
    %70 = arith.truncf %68 : vector<32x128xf32> to vector<32x128xbf16>
    %c7 = arith.constant 7 : index
    %c0_57 = arith.constant 0 : index
    %c0_58 = arith.constant 0 : index
    %71 = vector.load %arg1[%c7, %c0_57, %c0_58] : memref<16x128x128xbf16, #tpu.memory_space<vmem>>, vector<1x128x128xbf16>
    %72 = vector.shape_cast %71 : vector<1x128x128xbf16> to vector<128x128xbf16>
    %cst_59 = arith.constant dense<0.000000e+00> : vector<32x128xf32>
    %73 = tpu.matmul %70, %72, %cst_59 {dimension_numbers = #tpu.dot_dimension_numbers<[1], [0], [0], [1], [0, 0, 1, 1], [], []>} : vector<32x128xbf16>, vector<128x128xbf16>, vector<32x128xf32> -> vector<32x128xf32>
    %74 = arith.addf %69, %73 : vector<32x128xf32>
    %c0_60 = arith.constant 0 : index
    %c0_61 = arith.constant 0 : index
    %75 = vector.load %arg5[%c0_60, %c0_61] : memref<32x128xf32, #tpu.memory_space<vmem>>, vector<32x128xf32>
    tpu.vector_store %arg5[%c0_60, %c0_61], %74 {strides = array<i32>} : memref<32x128xf32, #tpu.memory_space<vmem>>, vector<32x128xf32>,
    %76 = vector.extract_strided_slice %1 {offsets = [0, 2, 0, 0], sizes = [2, 4, 4, 128], strides = [1, 1, 1, 1]} : vector<2x7x7x128xf32> to vector<2x4x4x128xf32>
    %77 = vector.shape_cast %76 : vector<2x4x4x128xf32> to vector<32x128xf32>
    %c0_62 = arith.constant 0 : index
    %c0_63 = arith.constant 0 : index
    %78 = vector.load %arg5[%c0_62, %c0_63] : memref<32x128xf32, #tpu.memory_space<vmem>>, vector<32x128xf32>
    %79 = arith.truncf %77 : vector<32x128xf32> to vector<32x128xbf16>
    %c8 = arith.constant 8 : index
    %c0_64 = arith.constant 0 : index
    %c0_65 = arith.constant 0 : index
    %80 = vector.load %arg1[%c8, %c0_64, %c0_65] : memref<16x128x128xbf16, #tpu.memory_space<vmem>>, vector<1x128x128xbf16>
    %81 = vector.shape_cast %80 : vector<1x128x128xbf16> to vector<128x128xbf16>
    %cst_66 = arith.constant dense<0.000000e+00> : vector<32x128xf32>
    %82 = tpu.matmul %79, %81, %cst_66 {dimension_numbers = #tpu.dot_dimension_numbers<[1], [0], [0], [1], [0, 0, 1, 1], [], []>} : vector<32x128xbf16>, vector<128x128xbf16>, vector<32x128xf32> -> vector<32x128xf32>
    %83 = arith.addf %78, %82 : vector<32x128xf32>
    %c0_67 = arith.constant 0 : index
    %c0_68 = arith.constant 0 : index
    %84 = vector.load %arg5[%c0_67, %c0_68] : memref<32x128xf32, #tpu.memory_space<vmem>>, vector<32x128xf32>
    tpu.vector_store %arg5[%c0_67, %c0_68], %83 {strides = array<i32>} : memref<32x128xf32, #tpu.memory_space<vmem>>, vector<32x128xf32>,
    %85 = vector.extract_strided_slice %1 {offsets = [0, 2, 1, 0], sizes = [2, 4, 4, 128], strides = [1, 1, 1, 1]} : vector<2x7x7x128xf32> to vector<2x4x4x128xf32>
    %86 = vector.shape_cast %85 : vector<2x4x4x128xf32> to vector<32x128xf32>
    %c0_69 = arith.constant 0 : index
    %c0_70 = arith.constant 0 : index
    %87 = vector.load %arg5[%c0_69, %c0_70] : memref<32x128xf32, #tpu.memory_space<vmem>>, vector<32x128xf32>
    %88 = arith.truncf %86 : vector<32x128xf32> to vector<32x128xbf16>
    %c9 = arith.constant 9 : index
    %c0_71 = arith.constant 0 : index
    %c0_72 = arith.constant 0 : index
    %89 = vector.load %arg1[%c9, %c0_71, %c0_72] : memref<16x128x128xbf16, #tpu.memory_space<vmem>>, vector<1x128x128xbf16>
    %90 = vector.shape_cast %89 : vector<1x128x128xbf16> to vector<128x128xbf16>
    %cst_73 = arith.constant dense<0.000000e+00> : vector<32x128xf32>
    %91 = tpu.matmul %88, %90, %cst_73 {dimension_numbers = #tpu.dot_dimension_numbers<[1], [0], [0], [1], [0, 0, 1, 1], [], []>} : vector<32x128xbf16>, vector<128x128xbf16>, vector<32x128xf32> -> vector<32x128xf32>
    %92 = arith.addf %87, %91 : vector<32x128xf32>
    %c0_74 = arith.constant 0 : index
    %c0_75 = arith.constant 0 : index
    %93 = vector.load %arg5[%c0_74, %c0_75] : memref<32x128xf32, #tpu.memory_space<vmem>>, vector<32x128xf32>
    tpu.vector_store %arg5[%c0_74, %c0_75], %92 {strides = array<i32>} : memref<32x128xf32, #tpu.memory_space<vmem>>, vector<32x128xf32>,
    %94 = vector.extract_strided_slice %1 {offsets = [0, 2, 2, 0], sizes = [2, 4, 4, 128], strides = [1, 1, 1, 1]} : vector<2x7x7x128xf32> to vector<2x4x4x128xf32>
    %95 = vector.shape_cast %94 : vector<2x4x4x128xf32> to vector<32x128xf32>
    %c0_76 = arith.constant 0 : index
    %c0_77 = arith.constant 0 : index
    %96 = vector.load %arg5[%c0_76, %c0_77] : memref<32x128xf32, #tpu.memory_space<vmem>>, vector<32x128xf32>
    %97 = arith.truncf %95 : vector<32x128xf32> to vector<32x128xbf16>
    %c10 = arith.constant 10 : index
    %c0_78 = arith.constant 0 : index
    %c0_79 = arith.constant 0 : index
    %98 = vector.load %arg1[%c10, %c0_78, %c0_79] : memref<16x128x128xbf16, #tpu.memory_space<vmem>>, vector<1x128x128xbf16>
    %99 = vector.shape_cast %98 : vector<1x128x128xbf16> to vector<128x128xbf16>
    %cst_80 = arith.constant dense<0.000000e+00> : vector<32x128xf32>
    %100 = tpu.matmul %97, %99, %cst_80 {dimension_numbers = #tpu.dot_dimension_numbers<[1], [0], [0], [1], [0, 0, 1, 1], [], []>} : vector<32x128xbf16>, vector<128x128xbf16>, vector<32x128xf32> -> vector<32x128xf32>
    %101 = arith.addf %96, %100 : vector<32x128xf32>
    %c0_81 = arith.constant 0 : index
    %c0_82 = arith.constant 0 : index
    %102 = vector.load %arg5[%c0_81, %c0_82] : memref<32x128xf32, #tpu.memory_space<vmem>>, vector<32x128xf32>
    tpu.vector_store %arg5[%c0_81, %c0_82], %101 {strides = array<i32>} : memref<32x128xf32, #tpu.memory_space<vmem>>, vector<32x128xf32>,
    %103 = vector.extract_strided_slice %1 {offsets = [0, 2, 3, 0], sizes = [2, 4, 4, 128], strides = [1, 1, 1, 1]} : vector<2x7x7x128xf32> to vector<2x4x4x128xf32>
    %104 = vector.shape_cast %103 : vector<2x4x4x128xf32> to vector<32x128xf32>
    %c0_83 = arith.constant 0 : index
    %c0_84 = arith.constant 0 : index
    %105 = vector.load %arg5[%c0_83, %c0_84] : memref<32x128xf32, #tpu.memory_space<vmem>>, vector<32x128xf32>
    %106 = arith.truncf %104 : vector<32x128xf32> to vector<32x128xbf16>
    %c11 = arith.constant 11 : index
    %c0_85 = arith.constant 0 : index
    %c0_86 = arith.constant 0 : index
    %107 = vector.load %arg1[%c11, %c0_85, %c0_86] : memref<16x128x128xbf16, #tpu.memory_space<vmem>>, vector<1x128x128xbf16>
    %108 = vector.shape_cast %107 : vector<1x128x128xbf16> to vector<128x128xbf16>
    %cst_87 = arith.constant dense<0.000000e+00> : vector<32x128xf32>
    %109 = tpu.matmul %106, %108, %cst_87 {dimension_numbers = #tpu.dot_dimension_numbers<[1], [0], [0], [1], [0, 0, 1, 1], [], []>} : vector<32x128xbf16>, vector<128x128xbf16>, vector<32x128xf32> -> vector<32x128xf32>
    %110 = arith.addf %105, %109 : vector<32x128xf32>
    %c0_88 = arith.constant 0 : index
    %c0_89 = arith.constant 0 : index
    %111 = vector.load %arg5[%c0_88, %c0_89] : memref<32x128xf32, #tpu.memory_space<vmem>>, vector<32x128xf32>
    tpu.vector_store %arg5[%c0_88, %c0_89], %110 {strides = array<i32>} : memref<32x128xf32, #tpu.memory_space<vmem>>, vector<32x128xf32>,
    %112 = vector.extract_strided_slice %1 {offsets = [0, 3, 0, 0], sizes = [2, 4, 4, 128], strides = [1, 1, 1, 1]} : vector<2x7x7x128xf32> to vector<2x4x4x128xf32>
    %113 = vector.shape_cast %112 : vector<2x4x4x128xf32> to vector<32x128xf32>
    %c0_90 = arith.constant 0 : index
    %c0_91 = arith.constant 0 : index
    %114 = vector.load %arg5[%c0_90, %c0_91] : memref<32x128xf32, #tpu.memory_space<vmem>>, vector<32x128xf32>
    %115 = arith.truncf %113 : vector<32x128xf32> to vector<32x128xbf16>
    %c12 = arith.constant 12 : index
    %c0_92 = arith.constant 0 : index
    %c0_93 = arith.constant 0 : index
    %116 = vector.load %arg1[%c12, %c0_92, %c0_93] : memref<16x128x128xbf16, #tpu.memory_space<vmem>>, vector<1x128x128xbf16>
    %117 = vector.shape_cast %116 : vector<1x128x128xbf16> to vector<128x128xbf16>
    %cst_94 = arith.constant dense<0.000000e+00> : vector<32x128xf32>
    %118 = tpu.matmul %115, %117, %cst_94 {dimension_numbers = #tpu.dot_dimension_numbers<[1], [0], [0], [1], [0, 0, 1, 1], [], []>} : vector<32x128xbf16>, vector<128x128xbf16>, vector<32x128xf32> -> vector<32x128xf32>
    %119 = arith.addf %114, %118 : vector<32x128xf32>
    %c0_95 = arith.constant 0 : index
    %c0_96 = arith.constant 0 : index
    %120 = vector.load %arg5[%c0_95, %c0_96] : memref<32x128xf32, #tpu.memory_space<vmem>>, vector<32x128xf32>
    tpu.vector_store %arg5[%c0_95, %c0_96], %119 {strides = array<i32>} : memref<32x128xf32, #tpu.memory_space<vmem>>, vector<32x128xf32>,
    %121 = vector.extract_strided_slice %1 {offsets = [0, 3, 1, 0], sizes = [2, 4, 4, 128], strides = [1, 1, 1, 1]} : vector<2x7x7x128xf32> to vector<2x4x4x128xf32>
    %122 = vector.shape_cast %121 : vector<2x4x4x128xf32> to vector<32x128xf32>
    %c0_97 = arith.constant 0 : index
    %c0_98 = arith.constant 0 : index
    %123 = vector.load %arg5[%c0_97, %c0_98] : memref<32x128xf32, #tpu.memory_space<vmem>>, vector<32x128xf32>
    %124 = arith.truncf %122 : vector<32x128xf32> to vector<32x128xbf16>
    %c13 = arith.constant 13 : index
    %c0_99 = arith.constant 0 : index
    %c0_100 = arith.constant 0 : index
    %125 = vector.load %arg1[%c13, %c0_99, %c0_100] : memref<16x128x128xbf16, #tpu.memory_space<vmem>>, vector<1x128x128xbf16>
    %126 = vector.shape_cast %125 : vector<1x128x128xbf16> to vector<128x128xbf16>
    %cst_101 = arith.constant dense<0.000000e+00> : vector<32x128xf32>
    %127 = tpu.matmul %124, %126, %cst_101 {dimension_numbers = #tpu.dot_dimension_numbers<[1], [0], [0], [1], [0, 0, 1, 1], [], []>} : vector<32x128xbf16>, vector<128x128xbf16>, vector<32x128xf32> -> vector<32x128xf32>
    %128 = arith.addf %123, %127 : vector<32x128xf32>
    %c0_102 = arith.constant 0 : index
    %c0_103 = arith.constant 0 : index
    %129 = vector.load %arg5[%c0_102, %c0_103] : memref<32x128xf32, #tpu.memory_space<vmem>>, vector<32x128xf32>
    tpu.vector_store %arg5[%c0_102, %c0_103], %128 {strides = array<i32>} : memref<32x128xf32, #tpu.memory_space<vmem>>, vector<32x128xf32>,
    %130 = vector.extract_strided_slice %1 {offsets = [0, 3, 2, 0], sizes = [2, 4, 4, 128], strides = [1, 1, 1, 1]} : vector<2x7x7x128xf32> to vector<2x4x4x128xf32>
    %131 = vector.shape_cast %130 : vector<2x4x4x128xf32> to vector<32x128xf32>
    %c0_104 = arith.constant 0 : index
    %c0_105 = arith.constant 0 : index
    %132 = vector.load %arg5[%c0_104, %c0_105] : memref<32x128xf32, #tpu.memory_space<vmem>>, vector<32x128xf32>
    %133 = arith.truncf %131 : vector<32x128xf32> to vector<32x128xbf16>
    %c14 = arith.constant 14 : index
    %c0_106 = arith.constant 0 : index
    %c0_107 = arith.constant 0 : index
    %134 = vector.load %arg1[%c14, %c0_106, %c0_107] : memref<16x128x128xbf16, #tpu.memory_space<vmem>>, vector<1x128x128xbf16>
    %135 = vector.shape_cast %134 : vector<1x128x128xbf16> to vector<128x128xbf16>
    %cst_108 = arith.constant dense<0.000000e+00> : vector<32x128xf32>
    %136 = tpu.matmul %133, %135, %cst_108 {dimension_numbers = #tpu.dot_dimension_numbers<[1], [0], [0], [1], [0, 0, 1, 1], [], []>} : vector<32x128xbf16>, vector<128x128xbf16>, vector<32x128xf32> -> vector<32x128xf32>
    %137 = arith.addf %132, %136 : vector<32x128xf32>
    %c0_109 = arith.constant 0 : index
    %c0_110 = arith.constant 0 : index
    %138 = vector.load %arg5[%c0_109, %c0_110] : memref<32x128xf32, #tpu.memory_space<vmem>>, vector<32x128xf32>
    tpu.vector_store %arg5[%c0_109, %c0_110], %137 {strides = array<i32>} : memref<32x128xf32, #tpu.memory_space<vmem>>, vector<32x128xf32>,
    %139 = vector.extract_strided_slice %1 {offsets = [0, 3, 3, 0], sizes = [2, 4, 4, 128], strides = [1, 1, 1, 1]} : vector<2x7x7x128xf32> to vector<2x4x4x128xf32>
    %140 = vector.shape_cast %139 : vector<2x4x4x128xf32> to vector<32x128xf32>
    %c0_111 = arith.constant 0 : index
    %c0_112 = arith.constant 0 : index
    %141 = vector.load %arg5[%c0_111, %c0_112] : memref<32x128xf32, #tpu.memory_space<vmem>>, vector<32x128xf32>
    %142 = arith.truncf %140 : vector<32x128xf32> to vector<32x128xbf16>
    %c15 = arith.constant 15 : index
    %c0_113 = arith.constant 0 : index
    %c0_114 = arith.constant 0 : index
    %143 = vector.load %arg1[%c15, %c0_113, %c0_114] : memref<16x128x128xbf16, #tpu.memory_space<vmem>>, vector<1x128x128xbf16>
    %144 = vector.shape_cast %143 : vector<1x128x128xbf16> to vector<128x128xbf16>
    %cst_115 = arith.constant dense<0.000000e+00> : vector<32x128xf32>
    %145 = tpu.matmul %142, %144, %cst_115 {dimension_numbers = #tpu.dot_dimension_numbers<[1], [0], [0], [1], [0, 0, 1, 1], [], []>} : vector<32x128xbf16>, vector<128x128xbf16>, vector<32x128xf32> -> vector<32x128xf32>
    %146 = arith.addf %141, %145 : vector<32x128xf32>
    %c0_116 = arith.constant 0 : index
    %c0_117 = arith.constant 0 : index
    %147 = vector.load %arg5[%c0_116, %c0_117] : memref<32x128xf32, #tpu.memory_space<vmem>>, vector<32x128xf32>
    tpu.vector_store %arg5[%c0_116, %c0_117], %146 {strides = array<i32>} : memref<32x128xf32, #tpu.memory_space<vmem>>, vector<32x128xf32>,
    %c0_118 = arith.constant 0 : index
    %c0_119 = arith.constant 0 : index
    %148 = vector.load %arg5[%c0_118, %c0_119] : memref<32x128xf32, #tpu.memory_space<vmem>>, vector<32x128xf32>
    %cst_120 = arith.constant dense<0.000000e+00> : vector<128xf32>
    %149 = vector.multi_reduction <add>, %148, %cst_120 [0] : vector<32x128xf32> to vector<128xf32>
    %150 = vector.shape_cast %149 : vector<128xf32> to vector<1x128xf32>
    %cst_121 = arith.constant 3.125000e-02 : f32
    %151 = vector.broadcast %cst_121 : f32 to vector<1x128xf32>
    %152 = arith.mulf %150, %151 : vector<1x128xf32>
    %153 = arith.mulf %148, %148 : vector<32x128xf32>
    %cst_122 = arith.constant dense<0.000000e+00> : vector<128xf32>
    %154 = vector.multi_reduction <add>, %153, %cst_122 [0] : vector<32x128xf32> to vector<128xf32>
    %155 = vector.shape_cast %154 : vector<128xf32> to vector<1x128xf32>
    %cst_123 = arith.constant 3.125000e-02 : f32
    %156 = vector.broadcast %cst_123 : f32 to vector<1x128xf32>
    %157 = arith.mulf %155, %156 : vector<1x128xf32>
    %158 = arith.mulf %152, %152 : vector<1x128xf32>
    %159 = arith.subf %157, %158 : vector<1x128xf32>
    %cst_124 = arith.constant 9.99999974E-6 : f32
    %160 = vector.broadcast %cst_124 : f32 to vector<1x128xf32>
    %161 = arith.addf %159, %160 : vector<1x128xf32>
    %162 = math.rsqrt %161 : vector<1x128xf32>
    %c0_125 = arith.constant 0 : index
    %c0_126 = arith.constant 0 : index
    %163 = vector.load %arg2[%c0_125, %c0_126] : memref<1x128xf32, #tpu.memory_space<vmem>>, vector<1x128xf32>
    %164 = arith.mulf %162, %163 : vector<1x128xf32>
    %c0_127 = arith.constant 0 : index
    %c0_128 = arith.constant 0 : index
    %165 = vector.load %arg3[%c0_127, %c0_128] : memref<1x128xf32, #tpu.memory_space<vmem>>, vector<1x128xf32>
    %166 = arith.mulf %152, %164 : vector<1x128xf32>
    %167 = arith.subf %165, %166 : vector<1x128xf32>
    %168 = vector.broadcast %164 : vector<1x128xf32> to vector<32x128xf32>
    %169 = arith.mulf %148, %168 : vector<32x128xf32>
    %170 = vector.broadcast %167 : vector<1x128xf32> to vector<32x128xf32>
    %171 = arith.addf %169, %170 : vector<32x128xf32>
    %cst_129 = arith.constant 0.000000e+00 : f32
    %172 = vector.broadcast %cst_129 : f32 to vector<32x128xf32>
    %173 = arith.maximumf %171, %172 : vector<32x128xf32>
    %174 = vector.shape_cast %173 : vector<32x128xf32> to vector<2x4x4x128xf32>
    %175 = arith.truncf %174 : vector<2x4x4x128xf32> to vector<2x4x4x128xbf16>
    %c0_130 = arith.constant 0 : index
    %c0_131 = arith.constant 0 : index
    %c0_132 = arith.constant 0 : index
    %c0_133 = arith.constant 0 : index
    %176 = vector.load %arg4[%c0_130, %c0_131, %c0_132, %c0_133] : memref<2x4x4x128xbf16, #tpu.memory_space<vmem>>, vector<2x4x4x128xbf16>
    tpu.vector_store %arg4[%c0_130, %c0_131, %c0_132, %c0_133], %175 {strides = array<i32>} : memref<2x4x4x128xbf16, #tpu.memory_space<vmem>>, vector<2x4x4x128xbf16>,
    return
  }
}

</mosaic_0001>

<llo_original>
// kernel: tpu_custom_call.1
$region0: #{tpu_custom_call.1}
  #allocation0 [shape = 'u32[]', space=smem, size = 0x4, offset = 0x4, fixed_abs, tag = 'smem constant byte address 0x4 - core index']
  #allocation1 [shape = 'u32[144,128]{1,0:T(1,128)}', space=vmem, size = 0x12000, scoped, tag = 'internal scratch']
  #allocation2 [shape = 'f32[32,128]{1,0:T(8,128)}', space=vmem, size = 0x4000, scoped, tag = 'scratch operand']
  %s0 = inlined_call_operand.vmem [shape: bf16[2,7,7,128], index: 0, kind: input, shape index: {}]
  %s1 = inlined_call_operand.hbm [shape: bf16[16,128,128], index: 1, kind: input, shape index: {}]
  %s2 = inlined_call_operand.vmem [shape: f32[1,128], index: 2, kind: input, shape index: {}]
  %s3 = inlined_call_operand.vmem [shape: f32[1,128], index: 3, kind: input, shape index: {}]
  %s4 = inlined_call_operand.hbm [shape: bf16[2,4,4,128], index: 4, kind: output, shape index: {}]
  %s5 = sld [smem:[#allocation0]]
  $region30: #{tpu_custom_call.1} parent=0
    _
  %s7 = ssub.s32 1, %s5
  %s8 = scalar_select 0, %s7, %s5
  $region1: #{tpu_custom_call.1} parent=0
    #allocation3 [shape = 'u8[524288]{0}', space=vmem, size = 0x80000, scoped, tag = 'input window, operand 1, single buffered']
    #allocation4 [shape = 's32[1]{0}', space=sflag, size = 0x4, scoped, tag = 'scoped memory for tpu_custom_call.1']
    #allocation5 [shape = 's32[1]{0}', space=sflag, size = 0x4, scoped, tag = 'scoped memory for tpu_custom_call.1']
    #allocation6 [shape = 'u8[8192]{0}', space=vmem, size = 0x2000, scoped, tag = 'output window, operand 0, single buffered']
    %9 = vsyncpa [#allocation4], 0
    %10 = vsyncpa [#allocation5], 0
    // Predicated region
    $region2: #{tpu_custom_call.1} parent=1 // pred_check
      _
    $region3: #{tpu_custom_call.1} parent=1 // pred_check_branch
      %12 = sbr.rel (0) target = $region5
    $region4: #{tpu_custom_call.1} parent=1 // pred_region
      _
    $region5: #{tpu_custom_call.1} parent=1 // pred_fallthru
      _
    // Predicated region
    $region6: #{tpu_custom_call.1} parent=1 // pred_check
      _
    $region7: #{tpu_custom_call.1} parent=1 // pred_check_branch
      %14 = sbr.rel (0) target = $region9
    $region8: #{tpu_custom_call.1} parent=1 // pred_region
      %s16 = ssub.s32 16384, 16384
      %17 = vsyncadd [#allocation4], %s16
      %s18 = sshll.u32 [#allocation3], 4
      %s19 = int_to_ptr.vmem [resolvable:$true] %s18
      %24 = dma.hbm_to_vmem [thread:$0]  %s1, 16384, %s19, [#allocation4], 64, 64, 4
    $region9: #{tpu_custom_call.1} parent=1 // pred_fallthru
      _
    // Predicated region
    $region10: #{tpu_custom_call.1} parent=1 // pred_check
      _
    $region11: #{tpu_custom_call.1} parent=1 // pred_check_branch
      %26 = sbr.rel (0) target = $region13
    $region12: #{tpu_custom_call.1} parent=1 // pred_region
      _
    $region13: #{tpu_custom_call.1} parent=1 // pred_fallthru
      _
    // Predicated region
    $region14: #{tpu_custom_call.1} parent=1 // pred_check
      _
    $region15: #{tpu_custom_call.1} parent=1 // pred_check_branch
      %28 = sbr.rel (0) target = $region17
    $region16: #{tpu_custom_call.1} parent=1 // pred_region
      _
    $region17: #{tpu_custom_call.1} parent=1 // pred_fallthru
      _
    // Predicated region
    $region18: #{tpu_custom_call.1} parent=1 // pred_check
      _
    $region19: #{tpu_custom_call.1} parent=1 // pred_check_branch
      %30 = sbr.rel (0) target = $region21
    $region20: #{tpu_custom_call.1} parent=1 // pred_region
      %31 = dma.done [#allocation4], 16384
    $region21: #{tpu_custom_call.1} parent=1 // pred_fallthru
      _
    %v33 = vld [vmem:[%s0] sm:$0xf]
    %v34 = vld [vmem:[%s0 + $0x4] sm:$0xf]
    %v35 = vld [vmem:[%s0 + $0x8] sm:$0xf]
    %v36 = vld [vmem:[%s0 + $0xc] sm:$0xf]
    %v37 = vld [vmem:[%s0 + $0x10] sm:$0xf]
    %v38 = vld [vmem:[%s0 + $0x14] sm:$0xf]
    %v39 = vld [vmem:[%s0 + $0x18] sm:$0xf]
    %v40 = vld [vmem:[%s0 + $0x1c] sm:$0xf]
    %v41 = vld [vmem:[%s0 + $0x20] sm:$0xf]
    %v42 = vld [vmem:[%s0 + $0x24] sm:$0xf]
    %v43 = vld [vmem:[%s0 + $0x28] sm:$0xf]
    %v44 = vld [vmem:[%s0 + $0x2c] sm:$0xf]
    %v45 = vld [vmem:[%s0 + $0x30] sm:$0xf]
    %v46 = vld [vmem:[%s0 + $0x34] sm:$0xf]
    %v47 = vunpack.c.l.bf16 %v33
    %v48 = vunpack.c.l.bf16 %v34
    %v49 = vunpack.c.l.bf16 %v35
    %v50 = vunpack.c.l.bf16 %v36
    %v51 = vunpack.c.l.bf16 %v37
    %v52 = vunpack.c.l.bf16 %v38
    %v53 = vunpack.c.l.bf16 %v39
    %v54 = vunpack.c.l.bf16 %v40
    %v55 = vunpack.c.l.bf16 %v41
    %v56 = vunpack.c.l.bf16 %v42
    %v57 = vunpack.c.l.bf16 %v43
    %v58 = vunpack.c.l.bf16 %v44
    %v59 = vunpack.c.l.bf16 %v45
    %v60 = vunpack.c.l.bf16 %v46
    %61 = vst [vmem:[#allocation2] sm:$0xff] 0.0
    %62 = vst [vmem:[#allocation2 + $0x8] sm:$0xff] 0.0
    %63 = vst [vmem:[#allocation2 + $0x10] sm:$0xff] 0.0
    %64 = vst [vmem:[#allocation2 + $0x18] sm:$0xff] 0.0
    %v65 = vld [vmem:[#allocation2] sm:$0xff]
    %v66 = vld [vmem:[#allocation2 + $0x8] sm:$0xff]
    %v67 = vld [vmem:[#allocation2 + $0x10] sm:$0xff]
    %v68 = vld [vmem:[#allocation2 + $0x18] sm:$0xff]
    %v77 = vcombine.low %v47, %v48
    %v78 = vcombine.low %v49, %v50
    %v79 = vcombine.low %v54, %v55
    %v80 = vcombine.low %v56, %v57
    %v85 = vpack.c.bf16 %v78, %v77
    %v86 = vpack.c.bf16 %v80, %v79
    %v87 = vld [vmem:[#allocation3] sm:$0xf]
    %v88 = vld [vmem:[#allocation3 + $0x4] sm:$0xf]
    %v89 = vld [vmem:[#allocation3 + $0x8] sm:$0xf]
    %v90 = vld [vmem:[#allocation3 + $0xc] sm:$0xf]
    %v91 = vld [vmem:[#allocation3 + $0x10] sm:$0xf]
    %v92 = vld [vmem:[#allocation3 + $0x14] sm:$0xf]
    %v93 = vld [vmem:[#allocation3 + $0x18] sm:$0xf]
    %v94 = vld [vmem:[#allocation3 + $0x1c] sm:$0xf]
    %v95 = vld [vmem:[#allocation3 + $0x20] sm:$0xf]
    %v96 = vld [vmem:[#allocation3 + $0x24] sm:$0xf]
    %v97 = vld [vmem:[#allocation3 + $0x28] sm:$0xf]
    %v98 = vld [vmem:[#allocation3 + $0x2c] sm:$0xf]
    %v99 = vld [vmem:[#allocation3 + $0x30] sm:$0xf]
    %v100 = vld [vmem:[#allocation3 + $0x34] sm:$0xf]
    %v101 = vld [vmem:[#allocation3 + $0x38] sm:$0xf]
    %v102 = vld [vmem:[#allocation3 + $0x3c] sm:$0xf]
    %v119 = vunpack.c.l.b16 %v87
    %v120 = vunpack.c.l.b16 %v88
    %v121 = vunpack.c.l.b16 %v89
    %v122 = vunpack.c.l.b16 %v90
    %v123 = vunpack.c.l.b16 %v91
    %v124 = vunpack.c.l.b16 %v92
    %v125 = vunpack.c.l.b16 %v93
    %v126 = vunpack.c.l.b16 %v94
    %v127 = vunpack.c.l.b16 %v95
    %v128 = vunpack.c.l.b16 %v96
    %v129 = vunpack.c.l.b16 %v97
    %v130 = vunpack.c.l.b16 %v98
    %v131 = vunpack.c.l.b16 %v99
    %v132 = vunpack.c.l.b16 %v100
    %v133 = vunpack.c.l.b16 %v101
    %v134 = vunpack.c.l.b16 %v102
    %v135 = vpack.c.b16 %v120, %v119
    %v136 = vpack.c.b16 %v122, %v121
    %v137 = vpack.c.b16 %v124, %v123
    %v138 = vpack.c.b16 %v126, %v125
    %v139 = vpack.c.b16 %v128, %v127
    %v140 = vpack.c.b16 %v130, %v129
    %v141 = vpack.c.b16 %v132, %v131
    %v142 = vpack.c.b16 %v134, %v133
    %151 = vmatprep.subr.bf16.mxu0 0
    %152 = vmatpush1.bf16.msra.mxu0 %v135
    %153 = vmatprep.subr.bf16.mxu0 0
    %154 = vmatpush1.bf16.msra.mxu0 %v136
    %155 = vmatprep.subr.bf16.mxu0 0
    %156 = vmatpush1.bf16.msra.mxu0 %v137
    %157 = vmatprep.subr.bf16.mxu0 0
    %158 = vmatpush1.bf16.msra.mxu0 %v138
    %159 = vmatprep.subr.bf16.mxu0 0
    %160 = vmatpush1.bf16.msra.mxu0 %v139
    %161 = vmatprep.subr.bf16.mxu0 0
    %162 = vmatpush1.bf16.msra.mxu0 %v140
    %163 = vmatprep.subr.bf16.mxu0 0
    %164 = vmatpush1.bf16.msra.mxu0 %v141
    %165 = vmatprep.subr.bf16.mxu0 0
    %166 = vmatpush1.bf16.msra.mxu0 %v142
    %167 = vmatprep.subr.bf16.mxu0 0
    %168 = vmatpush1.bf16.msra.mxu0 0
    %169 = vmatprep.subr.bf16.mxu0 0
    %170 = vmatpush1.bf16.msra.mxu0 0
    %171 = vmatprep.subr.bf16.mxu0 0
    %172 = vmatpush1.bf16.msra.mxu0 0
    %173 = vmatprep.subr.bf16.mxu0 0
    %174 = vmatpush1.bf16.msra.mxu0 0
    %175 = vmatprep.subr.bf16.mxu0 0
    %176 = vmatpush1.bf16.msra.mxu0 0
    %177 = vmatprep.subr.bf16.mxu0 0
    %178 = vmatpush1.bf16.msra.mxu0 0
    %179 = vmatprep.subr.bf16.mxu0 0
    %180 = vmatpush1.bf16.msra.mxu0 0
    %181 = vmatprep.subr.bf16.mxu0 0
    %182 = vmatpush1.bf16.msra.mxu0 0
    %183 = vmatprep.mubr.bf16.mxu0 0
    %184 = vmatmul.mubr.bf16.gmra.mrb[0].mxu0 %v85
    %v185 = vpop.f32.mrb[0].mxu0
    %v186 = vadd.f32 0.0, %v185
    %v187 = vpop.f32.mrb[0].mxu0
    %v188 = vpop.f32.mrb[0].mxu0
    %v189 = vadd.f32 0.0, %v188
    %v190 = vpop.f32.mrb[0].mxu0
    %191 = vmatprep.mubr.bf16.mxu0 0
    %192 = vmatmul.mubr.bf16.gmra.mrb[0].mxu0 %v86
    %v193 = vpop.f32.mrb[0].mxu0
    %v194 = vadd.f32 0.0, %v193
    %v195 = vpop.f32.mrb[0].mxu0
    %v196 = vpop.f32.mrb[0].mxu0
    %v197 = vadd.f32 0.0, %v196
    %v198 = vpop.f32.mrb[0].mxu0
    %199 = vdwg.mxu0
    %v200 = vadd.f32 %v65, %v186
    %v201 = vadd.f32 %v66, %v189
    %v202 = vadd.f32 %v67, %v194
    %v203 = vadd.f32 %v68, %v197
    %204 = vst [vmem:[#allocation2] sm:$0xff] %v200
    %205 = vst [vmem:[#allocation2 + $0x8] sm:$0xff] %v201
    %206 = vst [vmem:[#allocation2 + $0x10] sm:$0xff] %v202
    %207 = vst [vmem:[#allocation2 + $0x18] sm:$0xff] %v203
    %v208 = vcombine.high %v47, %v47
    %v209 = vcombine.high %v48, %v48
    %v210 = vcombine.high %v49, %v49
    %v211 = vcombine.high %v50, %v50
    %v212 = vcombine.high %v54, %v54
    %v213 = vcombine.high %v55, %v55
    %v214 = vcombine.high %v56, %v56
    %v215 = vcombine.high %v57, %v57
    %vm216 = vcmask 1042432
    %vm217 = vcmask 1046532
    %vm218 = vmor %vm216, %vm217
    %v219 = vrot.slane %v47, 5
    %v220 = vrot.slane %v219, 4
    %v221 = vrot.slane %v208, 5
    %v222 = vsel %vm218, %v220, %v221
    %v223 = vrot.slane %v48, 5
    %v224 = vrot.slane %v223, 4
    %v225 = vrot.slane %v209, 5
    %v226 = vsel %vm218, %v224, %v225
    %v227 = vrot.slane %v49, 5
    %v228 = vrot.slane %v227, 4
    %v229 = vrot.slane %v210, 5
    %v230 = vsel %vm218, %v228, %v229
    %v231 = vrot.slane %v50, 5
    %v232 = vrot.slane %v231, 4
    %v233 = vrot.slane %v211, 5
    %v234 = vsel %vm218, %v232, %v233
    %v235 = vrot.slane %v54, 5
    %v236 = vrot.slane %v235, 4
    %v237 = vrot.slane %v212, 5
    %v238 = vsel %vm218, %v236, %v237
    %v239 = vrot.slane %v55, 5
    %v240 = vrot.slane %v239, 4
    %v241 = vrot.slane %v213, 5
    %v242 = vsel %vm218, %v240, %v241
    %v243 = vrot.slane %v56, 5
    %v244 = vrot.slane %v243, 4
    %v245 = vrot.slane %v214, 5
    %v246 = vsel %vm218, %v244, %v245
    %v247 = vrot.slane %v57, 5
    %v248 = vrot.slane %v247, 4
    %v249 = vrot.slane %v215, 5
    %v250 = vsel %vm218, %v248, %v249
    %v251 = vld [vmem:[#allocation2] sm:$0xff]
    %v252 = vld [vmem:[#allocation2 + $0x8] sm:$0xff]
    %v253 = vld [vmem:[#allocation2 + $0x10] sm:$0xff]
    %v254 = vld [vmem:[#allocation2 + $0x18] sm:$0xff]
    %v255 = vcombine.low %v222, %v226
    %v256 = vcombine.low %v230, %v234
    %v257 = vcombine.low %v238, %v242
    %v258 = vcombine.low %v246, %v250
    %v263 = vpack.c.bf16 %v256, %v255
    %v264 = vpack.c.bf16 %v258, %v257
    %s265 = scalar_lea.vmem [#allocation3], 64
    %v266 = vld [vmem:[%s265] sm:$0xf]
    %v267 = vld [vmem:[%s265 + $0x4] sm:$0xf]
    %v268 = vld [vmem:[%s265 + $0x8] sm:$0xf]
    %v269 = vld [vmem:[%s265 + $0xc] sm:$0xf]
    %v270 = vld [vmem:[%s265 + $0x10] sm:$0xf]
    %v271 = vld [vmem:[%s265 + $0x14] sm:$0xf]
    %v272 = vld [vmem:[%s265 + $0x18] sm:$0xf]
    %v273 = vld [vmem:[%s265 + $0x1c] sm:$0xf]
    %v274 = vld [vmem:[%s265 + $0x20] sm:$0xf]
    %v275 = vld [vmem:[%s265 + $0x24] sm:$0xf]
    %v276 = vld [vmem:[%s265 + $0x28] sm:$0xf]
    %v277 = vld [vmem:[%s265 + $0x2c] sm:$0xf]
    %v278 = vld [vmem:[%s265 + $0x30] sm:$0xf]
    %v279 = vld [vmem:[%s265 + $0x34] sm:$0xf]
    %v280 = vld [vmem:[%s265 + $0x38] sm:$0xf]
    %v281 = vld [vmem:[%s265 + $0x3c] sm:$0xf]
    %v298 = vunpack.c.l.b16 %v266
    %v299 = vunpack.c.l.b16 %v267
    %v300 = vunpack.c.l.b16 %v268
    %v301 = vunpack.c.l.b16 %v269
    %v302 = vunpack.c.l.b16 %v270
    %v303 = vunpack.c.l.b16 %v271
    %v304 = vunpack.c.l.b16 %v272
    %v305 = vunpack.c.l.b16 %v273
    %v306 = vunpack.c.l.b16 %v274
    %v307 = vunpack.c.l.b16 %v275
    %v308 = vunpack.c.l.b16 %v276
    %v309 = vunpack.c.l.b16 %v277
    %v310 = vunpack.c.l.b16 %v278
    %v311 = vunpack.c.l.b16 %v279
    %v312 = vunpack.c.l.b16 %v280
    %v313 = vunpack.c.l.b16 %v281
    %v314 = vpack.c.b16 %v299, %v298
    %v315 = vpack.c.b16 %v301, %v300
    %v316 = vpack.c.b16 %v303, %v302
    %v317 = vpack.c.b16 %v305, %v304
    %v318 = vpack.c.b16 %v307, %v306
    %v319 = vpack.c.b16 %v309, %v308
    %v320 = vpack.c.b16 %v311, %v310
    %v321 = vpack.c.b16 %v313, %v312
    %330 = vmatprep.subr.bf16.mxu0 0
    %331 = vmatpush1.bf16.msra.mxu0 %v314
    %332 = vmatprep.subr.bf16.mxu0 0
    %333 = vmatpush1.bf16.msra.mxu0 %v315
    %334 = vmatprep.subr.bf16.mxu0 0
    %335 = vmatpush1.bf16.msra.mxu0 %v316
    %336 = vmatprep.subr.bf16.mxu0 0
    %337 = vmatpush1.bf16.msra.mxu0 %v317
    %338 = vmatprep.subr.bf16.mxu0 0
    %339 = vmatpush1.bf16.msra.mxu0 %v318
    %340 = vmatprep.subr.bf16.mxu0 0
    %341 = vmatpush1.bf16.msra.mxu0 %v319
    %342 = vmatprep.subr.bf16.mxu0 0
    %343 = vmatpush1.bf16.msra.mxu0 %v320
    %344 = vmatprep.subr.bf16.mxu0 0
    %345 = vmatpush1.bf16.msra.mxu0 %v321
    %346 = vmatprep.subr.bf16.mxu0 0
    %347 = vmatpush1.bf16.msra.mxu0 0
    %348 = vmatprep.subr.bf16.mxu0 0
    %349 = vmatpush1.bf16.msra.mxu0 0
    %350 = vmatprep.subr.bf16.mxu0 0
    %351 = vmatpush1.bf16.msra.mxu0 0
    %352 = vmatprep.subr.bf16.mxu0 0
    %353 = vmatpush1.bf16.msra.mxu0 0
    %354 = vmatprep.subr.bf16.mxu0 0
    %355 = vmatpush1.bf16.msra.mxu0 0
    %356 = vmatprep.subr.bf16.mxu0 0
    %357 = vmatpush1.bf16.msra.mxu0 0
    %358 = vmatprep.subr.bf16.mxu0 0
    %359 = vmatpush1.bf16.msra.mxu0 0
    %360 = vmatprep.subr.bf16.mxu0 0
    %361 = vmatpush1.bf16.msra.mxu0 0
    %362 = vmatprep.mubr.bf16.mxu0 0
    %363 = vmatmul.mubr.bf16.gmra.mrb[0].mxu0 %v263
    %v364 = vpop.f32.mrb[0].mxu0
    %v365 = vadd.f32 0.0, %v364
    %v366 = vpop.f32.mrb[0].mxu0
    %v367 = vpop.f32.mrb[0].mxu0
    %v368 = vadd.f32 0.0, %v367
    %v369 = vpop.f32.mrb[0].mxu0
    %370 = vmatprep.mubr.bf16.mxu0 0
    %371 = vmatmul.mubr.bf16.gmra.mrb[0].mxu0 %v264
    %v372 = vpop.f32.mrb[0].mxu0
    %v373 = vadd.f32 0.0, %v372
    %v374 = vpop.f32.mrb[0].mxu0
    %v375 = vpop.f32.mrb[0].mxu0
    %v376 = vadd.f32 0.0, %v375
    %v377 = vpop.f32.mrb[0].mxu0
    %378 = vdwg.mxu0
    %v379 = vadd.f32 %v251, %v365
    %v380 = vadd.f32 %v252, %v368
    %v381 = vadd.f32 %v253, %v373
    %v382 = vadd.f32 %v254, %v376
    %383 = vst [vmem:[#allocation2] sm:$0xff] %v379
    %384 = vst [vmem:[#allocation2 + $0x8] sm:$0xff] %v380
    %385 = vst [vmem:[#allocation2 + $0x10] sm:$0xff] %v381
    %386 = vst [vmem:[#allocation2 + $0x18] sm:$0xff] %v382
    %vm387 = vcmask 1041408
    %vm388 = vcmask 1045508
    %vm389 = vmor %vm387, %vm388
    %v390 = vrot.slane %v47, 6
    %v391 = vrot.slane %v390, 4
    %v392 = vrot.slane %v208, 6
    %v393 = vsel %vm389, %v391, %v392
    %v394 = vrot.slane %v48, 6
    %v395 = vrot.slane %v394, 4
    %v396 = vrot.slane %v209, 6
    %v397 = vsel %vm389, %v395, %v396
    %v398 = vrot.slane %v49, 6
    %v399 = vrot.slane %v398, 4
    %v400 = vrot.slane %v210, 6
    %v401 = vsel %vm389, %v399, %v400
    %v402 = vrot.slane %v50, 6
    %v403 = vrot.slane %v402, 4
    %v404 = vrot.slane %v211, 6
    %v405 = vsel %vm389, %v403, %v404
    %v406 = vrot.slane %v54, 6
    %v407 = vrot.slane %v406, 4
    %v408 = vrot.slane %v212, 6
    %v409 = vsel %vm389, %v407, %v408
    %v410 = vrot.slane %v55, 6
    %v411 = vrot.slane %v410, 4
    %v412 = vrot.slane %v213, 6
    %v413 = vsel %vm389, %v411, %v412
    %v414 = vrot.slane %v56, 6
    %v415 = vrot.slane %v414, 4
    %v416 = vrot.slane %v214, 6
    %v417 = vsel %vm389, %v415, %v416
    %v418 = vrot.slane %v57, 6
    %v419 = vrot.slane %v418, 4
    %v420 = vrot.slane %v215, 6
    %v421 = vsel %vm389, %v419, %v420
    %v422 = vld [vmem:[#allocation2] sm:$0xff]
    %v423 = vld [vmem:[#allocation2 + $0x8] sm:$0xff]
    %v424 = vld [vmem:[#allocation2 + $0x10] sm:$0xff]
    %v425 = vld [vmem:[#allocation2 + $0x18] sm:$0xff]
    %v426 = vcombine.low %v393, %v397
    %v427 = vcombine.low %v401, %v405
    %v428 = vcombine.low %v409, %v413
    %v429 = vcombine.low %v417, %v421
    %v434 = vpack.c.bf16 %v427, %v426
    %v435 = vpack.c.bf16 %v429, %v428
    %s436 = scalar_lea.vmem [#allocation3], 128
    %v437 = vld [vmem:[%s436] sm:$0xf]
    %v438 = vld [vmem:[%s436 + $0x4] sm:$0xf]
    %v439 = vld [vmem:[%s436 + $0x8] sm:$0xf]
    %v440 = vld [vmem:[%s436 + $0xc] sm:$0xf]
    %v441 = vld [vmem:[%s436 + $0x10] sm:$0xf]
    %v442 = vld [vmem:[%s436 + $0x14] sm:$0xf]
    %v443 = vld [vmem:[%s436 + $0x18] sm:$0xf]
    %v444 = vld [vmem:[%s436 + $0x1c] sm:$0xf]
    %v445 = vld [vmem:[%s436 + $0x20] sm:$0xf]
    %v446 = vld [vmem:[%s436 + $0x24] sm:$0xf]
    %v447 = vld [vmem:[%s436 + $0x28] sm:$0xf]
    %v448 = vld [vmem:[%s436 + $0x2c] sm:$0xf]
    %v449 = vld [vmem:[%s436 + $0x30] sm:$0xf]
    %v450 = vld [vmem:[%s436 + $0x34] sm:$0xf]
    %v451 = vld [vmem:[%s436 + $0x38] sm:$0xf]
    %v452 = vld [vmem:[%s436 + $0x3c] sm:$0xf]
    %v469 = vunpack.c.l.b16 %v437
    %v470 = vunpack.c.l.b16 %v438
    %v471 = vunpack.c.l.b16 %v439
    %v472 = vunpack.c.l.b16 %v440
    %v473 = vunpack.c.l.b16 %v441
    %v474 = vunpack.c.l.b16 %v442
    %v475 = vunpack.c.l.b16 %v443
    %v476 = vunpack.c.l.b16 %v444
    %v477 = vunpack.c.l.b16 %v445
    %v478 = vunpack.c.l.b16 %v446
    %v479 = vunpack.c.l.b16 %v447
    %v480 = vunpack.c.l.b16 %v448
    %v481 = vunpack.c.l.b16 %v449
    %v482 = vunpack.c.l.b16 %v450
    %v483 = vunpack.c.l.b16 %v451
    %v484 = vunpack.c.l.b16 %v452
    %v485 = vpack.c.b16 %v470, %v469
    %v486 = vpack.c.b16 %v472, %v471
    %v487 = vpack.c.b16 %v474, %v473
    %v488 = vpack.c.b16 %v476, %v475
    %v489 = vpack.c.b16 %v478, %v477
    %v490 = vpack.c.b16 %v480, %v479
    %v491 = vpack.c.b16 %v482, %v481
    %v492 = vpack.c.b16 %v484, %v483
    %501 = vmatprep.subr.bf16.mxu0 0
    %502 = vmatpush1.bf16.msra.mxu0 %v485
    %503 = vmatprep.subr.bf16.mxu0 0
    %504 = vmatpush1.bf16.msra.mxu0 %v486
    %505 = vmatprep.subr.bf16.mxu0 0
    %506 = vmatpush1.bf16.msra.mxu0 %v487
    %507 = vmatprep.subr.bf16.mxu0 0
    %508 = vmatpush1.bf16.msra.mxu0 %v488
    %509 = vmatprep.subr.bf16.mxu0 0
    %510 = vmatpush1.bf16.msra.mxu0 %v489
    %511 = vmatprep.subr.bf16.mxu0 0
    %512 = vmatpush1.bf16.msra.mxu0 %v490
    %513 = vmatprep.subr.bf16.mxu0 0
    %514 = vmatpush1.bf16.msra.mxu0 %v491
    %515 = vmatprep.subr.bf16.mxu0 0
    %516 = vmatpush1.bf16.msra.mxu0 %v492
    %517 = vmatprep.subr.bf16.mxu0 0
    %518 = vmatpush1.bf16.msra.mxu0 0
    %519 = vmatprep.subr.bf16.mxu0 0
    %520 = vmatpush1.bf16.msra.mxu0 0
    %521 = vmatprep.subr.bf16.mxu0 0
    %522 = vmatpush1.bf16.msra.mxu0 0
    %523 = vmatprep.subr.bf16.mxu0 0
    %524 = vmatpush1.bf16.msra.mxu0 0
    %525 = vmatprep.subr.bf16.mxu0 0
    %526 = vmatpush1.bf16.msra.mxu0 0
    %527 = vmatprep.subr.bf16.mxu0 0
    %528 = vmatpush1.bf16.msra.mxu0 0
    %529 = vmatprep.subr.bf16.mxu0 0
    %530 = vmatpush1.bf16.msra.mxu0 0
    %531 = vmatprep.subr.bf16.mxu0 0
    %532 = vmatpush1.bf16.msra.mxu0 0
    %533 = vmatprep.mubr.bf16.mxu0 0
    %534 = vmatmul.mubr.bf16.gmra.mrb[0].mxu0 %v434
    %v535 = vpop.f32.mrb[0].mxu0
    %v536 = vadd.f32 0.0, %v535
    %v537 = vpop.f32.mrb[0].mxu0
    %v538 = vpop.f32.mrb[0].mxu0
    %v539 = vadd.f32 0.0, %v538
    %v540 = vpop.f32.mrb[0].mxu0
    %541 = vmatprep.mubr.bf16.mxu0 0
    %542 = vmatmul.mubr.bf16.gmra.mrb[0].mxu0 %v435
    %v543 = vpop.f32.mrb[0].mxu0
    %v544 = vadd.f32 0.0, %v543
    %v545 = vpop.f32.mrb[0].mxu0
    %v546 = vpop.f32.mrb[0].mxu0
    %v547 = vadd.f32 0.0, %v546
    %v548 = vpop.f32.mrb[0].mxu0
    %549 = vdwg.mxu0
    %v550 = vadd.f32 %v422, %v536
    %v551 = vadd.f32 %v423, %v539
    %v552 = vadd.f32 %v424, %v544
    %v553 = vadd.f32 %v425, %v547
    %554 = vst [vmem:[#allocation2] sm:$0xff] %v550
    %555 = vst [vmem:[#allocation2 + $0x8] sm:$0xff] %v551
    %556 = vst [vmem:[#allocation2 + $0x10] sm:$0xff] %v552
    %557 = vst [vmem:[#allocation2 + $0x18] sm:$0xff] %v553
    %vm558 = vcmask 1040384
    %vm559 = vcmask 1044484
    %vm560 = vmor %vm558, %vm559
    %v561 = vrot.slane %v47, 7
    %v562 = vrot.slane %v561, 4
    %v563 = vrot.slane %v208, 7
    %v564 = vsel %vm560, %v562, %v563
    %v565 = vrot.slane %v48, 7
    %v566 = vrot.slane %v565, 4
    %v567 = vrot.slane %v209, 7
    %v568 = vsel %vm560, %v566, %v567
    %v569 = vrot.slane %v49, 7
    %v570 = vrot.slane %v569, 4
    %v571 = vrot.slane %v210, 7
    %v572 = vsel %vm560, %v570, %v571
    %v573 = vrot.slane %v50, 7
    %v574 = vrot.slane %v573, 4
    %v575 = vrot.slane %v211, 7
    %v576 = vsel %vm560, %v574, %v575
    %v577 = vrot.slane %v54, 7
    %v578 = vrot.slane %v577, 4
    %v579 = vrot.slane %v212, 7
    %v580 = vsel %vm560, %v578, %v579
    %v581 = vrot.slane %v55, 7
    %v582 = vrot.slane %v581, 4
    %v583 = vrot.slane %v213, 7
    %v584 = vsel %vm560, %v582, %v583
    %v585 = vrot.slane %v56, 7
    %v586 = vrot.slane %v585, 4
    %v587 = vrot.slane %v214, 7
    %v588 = vsel %vm560, %v586, %v587
    %v589 = vrot.slane %v57, 7
    %v590 = vrot.slane %v589, 4
    %v591 = vrot.slane %v215, 7
    %v592 = vsel %vm560, %v590, %v591
    %v593 = vld [vmem:[#allocation2] sm:$0xff]
    %v594 = vld [vmem:[#allocation2 + $0x8] sm:$0xff]
    %v595 = vld [vmem:[#allocation2 + $0x10] sm:$0xff]
    %v596 = vld [vmem:[#allocation2 + $0x18] sm:$0xff]
    %v597 = vcombine.low %v564, %v568
    %v598 = vcombine.low %v572, %v576
    %v599 = vcombine.low %v580, %v584
    %v600 = vcombine.low %v588, %v592
    %v605 = vpack.c.bf16 %v598, %v597
    %v606 = vpack.c.bf16 %v600, %v599
    %s607 = scalar_lea.vmem [#allocation3], 192
    %v608 = vld [vmem:[%s607] sm:$0xf]
    %v609 = vld [vmem:[%s607 + $0x4] sm:$0xf]
    %v610 = vld [vmem:[%s607 + $0x8] sm:$0xf]
    %v611 = vld [vmem:[%s607 + $0xc] sm:$0xf]
    %v612 = vld [vmem:[%s607 + $0x10] sm:$0xf]
    %v613 = vld [vmem:[%s607 + $0x14] sm:$0xf]
    %v614 = vld [vmem:[%s607 + $0x18] sm:$0xf]
    %v615 = vld [vmem:[%s607 + $0x1c] sm:$0xf]
    %v616 = vld [vmem:[%s607 + $0x20] sm:$0xf]
    %v617 = vld [vmem:[%s607 + $0x24] sm:$0xf]
    %v618 = vld [vmem:[%s607 + $0x28] sm:$0xf]
    %v619 = vld [vmem:[%s607 + $0x2c] sm:$0xf]
    %v620 = vld [vmem:[%s607 + $0x30] sm:$0xf]
    %v621 = vld [vmem:[%s607 + $0x34] sm:$0xf]
    %v622 = vld [vmem:[%s607 + $0x38] sm:$0xf]
    %v623 = vld [vmem:[%s607 + $0x3c] sm:$0xf]
    %v640 = vunpack.c.l.b16 %v608
    %v641 = vunpack.c.l.b16 %v609
    %v642 = vunpack.c.l.b16 %v610
    %v643 = vunpack.c.l.b16 %v611
    %v644 = vunpack.c.l.b16 %v612
    %v645 = vunpack.c.l.b16 %v613
    %v646 = vunpack.c.l.b16 %v614
    %v647 = vunpack.c.l.b16 %v615
    %v648 = vunpack.c.l.b16 %v616
    %v649 = vunpack.c.l.b16 %v617
    %v650 = vunpack.c.l.b16 %v618
    %v651 = vunpack.c.l.b16 %v619
    %v652 = vunpack.c.l.b16 %v620
    %v653 = vunpack.c.l.b16 %v621
    %v654 = vunpack.c.l.b16 %v622
    %v655 = vunpack.c.l.b16 %v623
    %v656 = vpack.c.b16 %v641, %v640
    %v657 = vpack.c.b16 %v643, %v642
    %v658 = vpack.c.b16 %v645, %v644
    %v659 = vpack.c.b16 %v647, %v646
    %v660 = vpack.c.b16 %v649, %v648
    %v661 = vpack.c.b16 %v651, %v650
    %v662 = vpack.c.b16 %v653, %v652
    %v663 = vpack.c.b16 %v655, %v654
    %672 = vmatprep.subr.bf16.mxu0 0
    %673 = vmatpush1.bf16.msra.mxu0 %v656
    %674 = vmatprep.subr.bf16.mxu0 0
    %675 = vmatpush1.bf16.msra.mxu0 %v657
    %676 = vmatprep.subr.bf16.mxu0 0
    %677 = vmatpush1.bf16.msra.mxu0 %v658
    %678 = vmatprep.subr.bf16.mxu0 0
    %679 = vmatpush1.bf16.msra.mxu0 %v659
    %680 = vmatprep.subr.bf16.mxu0 0
    %681 = vmatpush1.bf16.msra.mxu0 %v660
    %682 = vmatprep.subr.bf16.mxu0 0
    %683 = vmatpush1.bf16.msra.mxu0 %v661
    %684 = vmatprep.subr.bf16.mxu0 0
    %685 = vmatpush1.bf16.msra.mxu0 %v662
    %686 = vmatprep.subr.bf16.mxu0 0
    %687 = vmatpush1.bf16.msra.mxu0 %v663
    %688 = vmatprep.subr.bf16.mxu0 0
    %689 = vmatpush1.bf16.msra.mxu0 0
    %690 = vmatprep.subr.bf16.mxu0 0
    %691 = vmatpush1.bf16.msra.mxu0 0
    %692 = vmatprep.subr.bf16.mxu0 0
    %693 = vmatpush1.bf16.msra.mxu0 0
    %694 = vmatprep.subr.bf16.mxu0 0
    %695 = vmatpush1.bf16.msra.mxu0 0
    %696 = vmatprep.subr.bf16.mxu0 0
    %697 = vmatpush1.bf16.msra.mxu0 0
    %698 = vmatprep.subr.bf16.mxu0 0
    %699 = vmatpush1.bf16.msra.mxu0 0
    %700 = vmatprep.subr.bf16.mxu0 0
    %701 = vmatpush1.bf16.msra.mxu0 0
    %702 = vmatprep.subr.bf16.mxu0 0
    %703 = vmatpush1.bf16.msra.mxu0 0
    %704 = vmatprep.mubr.bf16.mxu0 0
    %705 = vmatmul.mubr.bf16.gmra.mrb[0].mxu0 %v605
    %v706 = vpop.f32.mrb[0].mxu0
    %v707 = vadd.f32 0.0, %v706
    %v708 = vpop.f32.mrb[0].mxu0
    %v709 = vpop.f32.mrb[0].mxu0
    %v710 = vadd.f32 0.0, %v709
    %v711 = vpop.f32.mrb[0].mxu0
    %712 = vmatprep.mubr.bf16.mxu0 0
    %713 = vmatmul.mubr.bf16.gmra.mrb[0].mxu0 %v606
    %v714 = vpop.f32.mrb[0].mxu0
    %v715 = vadd.f32 0.0, %v714
    %v716 = vpop.f32.mrb[0].mxu0
    %v717 = vpop.f32.mrb[0].mxu0
    %v718 = vadd.f32 0.0, %v717
    %v719 = vpop.f32.mrb[0].mxu0
    %720 = vdwg.mxu0
    %v721 = vadd.f32 %v593, %v707
    %v722 = vadd.f32 %v594, %v710
    %v723 = vadd.f32 %v595, %v715
    %v724 = vadd.f32 %v596, %v718
    %725 = vst [vmem:[#allocation2] sm:$0xff] %v721
    %726 = vst [vmem:[#allocation2 + $0x8] sm:$0xff] %v722
    %727 = vst [vmem:[#allocation2 + $0x10] sm:$0xff] %v723
    %728 = vst [vmem:[#allocation2 + $0x18] sm:$0xff] %v724
    %v729 = vld [vmem:[#allocation2] sm:$0xff]
    %v730 = vld [vmem:[#allocation2 + $0x8] sm:$0xff]
    %v731 = vld [vmem:[#allocation2 + $0x10] sm:$0xff]
    %v732 = vld [vmem:[#allocation2 + $0x18] sm:$0xff]
    %v735 = vcombine.low %v48, %v49
    %v736 = vcombine.low %v50, %v51
    %v737 = vcombine.low %v55, %v56
    %v738 = vcombine.low %v57, %v58
    %v743 = vpack.c.bf16 %v736, %v735
    %v744 = vpack.c.bf16 %v738, %v737
    %s745 = scalar_lea.vmem [#allocation3], 256
    %v746 = vld [vmem:[%s745] sm:$0xf]
    %v747 = vld [vmem:[%s745 + $0x4] sm:$0xf]
    %v748 = vld [vmem:[%s745 + $0x8] sm:$0xf]
    %v749 = vld [vmem:[%s745 + $0xc] sm:$0xf]
    %v750 = vld [vmem:[%s745 + $0x10] sm:$0xf]
    %v751 = vld [vmem:[%s745 + $0x14] sm:$0xf]
    %v752 = vld [vmem:[%s745 + $0x18] sm:$0xf]
    %v753 = vld [vmem:[%s745 + $0x1c] sm:$0xf]
    %v754 = vld [vmem:[%s745 + $0x20] sm:$0xf]
    %v755 = vld [vmem:[%s745 + $0x24] sm:$0xf]
    %v756 = vld [vmem:[%s745 + $0x28] sm:$0xf]
    %v757 = vld [vmem:[%s745 + $0x2c] sm:$0xf]
    %v758 = vld [vmem:[%s745 + $0x30] sm:$0xf]
    %v759 = vld [vmem:[%s745 + $0x34] sm:$0xf]
    %v760 = vld [vmem:[%s745 + $0x38] sm:$0xf]
    %v761 = vld [vmem:[%s745 + $0x3c] sm:$0xf]
    %v778 = vunpack.c.l.b16 %v746
    %v779 = vunpack.c.l.b16 %v747
    %v780 = vunpack.c.l.b16 %v748
    %v781 = vunpack.c.l.b16 %v749
    %v782 = vunpack.c.l.b16 %v750
    %v783 = vunpack.c.l.b16 %v751
    %v784 = vunpack.c.l.b16 %v752
    %v785 = vunpack.c.l.b16 %v753
    %v786 = vunpack.c.l.b16 %v754
    %v787 = vunpack.c.l.b16 %v755
    %v788 = vunpack.c.l.b16 %v756
    %v789 = vunpack.c.l.b16 %v757
    %v790 = vunpack.c.l.b16 %v758
    %v791 = vunpack.c.l.b16 %v759
    %v792 = vunpack.c.l.b16 %v760
    %v793 = vunpack.c.l.b16 %v761
    %v794 = vpack.c.b16 %v779, %v778
    %v795 = vpack.c.b16 %v781, %v780
    %v796 = vpack.c.b16 %v783, %v782
    %v797 = vpack.c.b16 %v785, %v784
    %v798 = vpack.c.b16 %v787, %v786
    %v799 = vpack.c.b16 %v789, %v788
    %v800 = vpack.c.b16 %v791, %v790
    %v801 = vpack.c.b16 %v793, %v792
    %810 = vmatprep.subr.bf16.mxu0 0
    %811 = vmatpush1.bf16.msra.mxu0 %v794
    %812 = vmatprep.subr.bf16.mxu0 0
    %813 = vmatpush1.bf16.msra.mxu0 %v795
    %814 = vmatprep.subr.bf16.mxu0 0
    %815 = vmatpush1.bf16.msra.mxu0 %v796
    %816 = vmatprep.subr.bf16.mxu0 0
    %817 = vmatpush1.bf16.msra.mxu0 %v797
    %818 = vmatprep.subr.bf16.mxu0 0
    %819 = vmatpush1.bf16.msra.mxu0 %v798
    %820 = vmatprep.subr.bf16.mxu0 0
    %821 = vmatpush1.bf16.msra.mxu0 %v799
    %822 = vmatprep.subr.bf16.mxu0 0
    %823 = vmatpush1.bf16.msra.mxu0 %v800
    %824 = vmatprep.subr.bf16.mxu0 0
    %825 = vmatpush1.bf16.msra.mxu0 %v801
    %826 = vmatprep.subr.bf16.mxu0 0
    %827 = vmatpush1.bf16.msra.mxu0 0
    %828 = vmatprep.subr.bf16.mxu0 0
    %829 = vmatpush1.bf16.msra.mxu0 0
    %830 = vmatprep.subr.bf16.mxu0 0
    %831 = vmatpush1.bf16.msra.mxu0 0
    %832 = vmatprep.subr.bf16.mxu0 0
    %833 = vmatpush1.bf16.msra.mxu0 0
    %834 = vmatprep.subr.bf16.mxu0 0
    %835 = vmatpush1.bf16.msra.mxu0 0
    %836 = vmatprep.subr.bf16.mxu0 0
    %837 = vmatpush1.bf16.msra.mxu0 0
    %838 = vmatprep.subr.bf16.mxu0 0
    %839 = vmatpush1.bf16.msra.mxu0 0
    %840 = vmatprep.subr.bf16.mxu0 0
    %841 = vmatpush1.bf16.msra.mxu0 0
    %842 = vmatprep.mubr.bf16.mxu0 0
    %843 = vmatmul.mubr.bf16.gmra.mrb[0].mxu0 %v743
    %v844 = vpop.f32.mrb[0].mxu0
    %v845 = vadd.f32 0.0, %v844
    %v846 = vpop.f32.mrb[0].mxu0
    %v847 = vpop.f32.mrb[0].mxu0
    %v848 = vadd.f32 0.0, %v847
    %v849 = vpop.f32.mrb[0].mxu0
    %850 = vmatprep.mubr.bf16.mxu0 0
    %851 = vmatmul.mubr.bf16.gmra.mrb[0].mxu0 %v744
    %v852 = vpop.f32.mrb[0].mxu0
    %v853 = vadd.f32 0.0, %v852
    %v854 = vpop.f32.mrb[0].mxu0
    %v855 = vpop.f32.mrb[0].mxu0
    %v856 = vadd.f32 0.0, %v855
    %v857 = vpop.f32.mrb[0].mxu0
    %858 = vdwg.mxu0
    %v859 = vadd.f32 %v729, %v845
    %v860 = vadd.f32 %v730, %v848
    %v861 = vadd.f32 %v731, %v853
    %v862 = vadd.f32 %v732, %v856
    %863 = vst [vmem:[#allocation2] sm:$0xff] %v859
    %864 = vst [vmem:[#allocation2 + $0x8] sm:$0xff] %v860
    %865 = vst [vmem:[#allocation2 + $0x10] sm:$0xff] %v861
    %866 = vst [vmem:[#allocation2 + $0x18] sm:$0xff] %v862
    %v867 = vcombine.high %v51, %v51
    %v868 = vcombine.high %v58, %v58
    %v869 = vrot.slane %v51, 5
    %v870 = vrot.slane %v869, 4
    %v871 = vrot.slane %v867, 5
    %v872 = vsel %vm218, %v870, %v871
    %v873 = vrot.slane %v58, 5
    %v874 = vrot.slane %v873, 4
    %v875 = vrot.slane %v868, 5
    %v876 = vsel %vm218, %v874, %v875
    %v877 = vld [vmem:[#allocation2] sm:$0xff]
    %v878 = vld [vmem:[#allocation2 + $0x8] sm:$0xff]
    %v879 = vld [vmem:[#allocation2 + $0x10] sm:$0xff]
    %v880 = vld [vmem:[#allocation2 + $0x18] sm:$0xff]
    %v881 = vcombine.low %v226, %v230
    %v882 = vcombine.low %v234, %v872
    %v883 = vcombine.low %v242, %v246
    %v884 = vcombine.low %v250, %v876
    %v889 = vpack.c.bf16 %v882, %v881
    %v890 = vpack.c.bf16 %v884, %v883
    %s891 = scalar_lea.vmem [#allocation3], 320
    %v892 = vld [vmem:[%s891] sm:$0xf]
    %v893 = vld [vmem:[%s891 + $0x4] sm:$0xf]
    %v894 = vld [vmem:[%s891 + $0x8] sm:$0xf]
    %v895 = vld [vmem:[%s891 + $0xc] sm:$0xf]
    %v896 = vld [vmem:[%s891 + $0x10] sm:$0xf]
    %v897 = vld [vmem:[%s891 + $0x14] sm:$0xf]
    %v898 = vld [vmem:[%s891 + $0x18] sm:$0xf]
    %v899 = vld [vmem:[%s891 + $0x1c] sm:$0xf]
    %v900 = vld [vmem:[%s891 + $0x20] sm:$0xf]
    %v901 = vld [vmem:[%s891 + $0x24] sm:$0xf]
    %v902 = vld [vmem:[%s891 + $0x28] sm:$0xf]
    %v903 = vld [vmem:[%s891 + $0x2c] sm:$0xf]
    %v904 = vld [vmem:[%s891 + $0x30] sm:$0xf]
    %v905 = vld [vmem:[%s891 + $0x34] sm:$0xf]
    %v906 = vld [vmem:[%s891 + $0x38] sm:$0xf]
    %v907 = vld [vmem:[%s891 + $0x3c] sm:$0xf]
    %v924 = vunpack.c.l.b16 %v892
    %v925 = vunpack.c.l.b16 %v893
    %v926 = vunpack.c.l.b16 %v894
    %v927 = vunpack.c.l.b16 %v895
    %v928 = vunpack.c.l.b16 %v896
    %v929 = vunpack.c.l.b16 %v897
    %v930 = vunpack.c.l.b16 %v898
    %v931 = vunpack.c.l.b16 %v899
    %v932 = vunpack.c.l.b16 %v900
    %v933 = vunpack.c.l.b16 %v901
    %v934 = vunpack.c.l.b16 %v902
    %v935 = vunpack.c.l.b16 %v903
    %v936 = vunpack.c.l.b16 %v904
    %v937 = vunpack.c.l.b16 %v905
    %v938 = vunpack.c.l.b16 %v906
    %v939 = vunpack.c.l.b16 %v907
    %v940 = vpack.c.b16 %v925, %v924
    %v941 = vpack.c.b16 %v927, %v926
    %v942 = vpack.c.b16 %v929, %v928
    %v943 = vpack.c.b16 %v931, %v930
    %v944 = vpack.c.b16 %v933, %v932
    %v945 = vpack.c.b16 %v935, %v934
    %v946 = vpack.c.b16 %v937, %v936
    %v947 = vpack.c.b16 %v939, %v938
    %956 = vmatprep.subr.bf16.mxu0 0
    %957 = vmatpush1.bf16.msra.mxu0 %v940
    %958 = vmatprep.subr.bf16.mxu0 0
    %959 = vmatpush1.bf16.msra.mxu0 %v941
    %960 = vmatprep.subr.bf16.mxu0 0
    %961 = vmatpush1.bf16.msra.mxu0 %v942
    %962 = vmatprep.subr.bf16.mxu0 0
    %963 = vmatpush1.bf16.msra.mxu0 %v943
    %964 = vmatprep.subr.bf16.mxu0 0
    %965 = vmatpush1.bf16.msra.mxu0 %v944
    %966 = vmatprep.subr.bf16.mxu0 0
    %967 = vmatpush1.bf16.msra.mxu0 %v945
    %968 = vmatprep.subr.bf16.mxu0 0
    %969 = vmatpush1.bf16.msra.mxu0 %v946
    %970 = vmatprep.subr.bf16.mxu0 0
    %971 = vmatpush1.bf16.msra.mxu0 %v947
    %972 = vmatprep.subr.bf16.mxu0 0
    %973 = vmatpush1.bf16.msra.mxu0 0
    %974 = vmatprep.subr.bf16.mxu0 0
    %975 = vmatpush1.bf16.msra.mxu0 0
    %976 = vmatprep.subr.bf16.mxu0 0
    %977 = vmatpush1.bf16.msra.mxu0 0
    %978 = vmatprep.subr.bf16.mxu0 0
    %979 = vmatpush1.bf16.msra.mxu0 0
    %980 = vmatprep.subr.bf16.mxu0 0
    %981 = vmatpush1.bf16.msra.mxu0 0
    %982 = vmatprep.subr.bf16.mxu0 0
    %983 = vmatpush1.bf16.msra.mxu0 0
    %984 = vmatprep.subr.bf16.mxu0 0
    %985 = vmatpush1.bf16.msra.mxu0 0
    %986 = vmatprep.subr.bf16.mxu0 0
    %987 = vmatpush1.bf16.msra.mxu0 0
    %988 = vmatprep.mubr.bf16.mxu0 0
    %989 = vmatmul.mubr.bf16.gmra.mrb[0].mxu0 %v889
    %v990 = vpop.f32.mrb[0].mxu0
    %v991 = vadd.f32 0.0, %v990
    %v992 = vpop.f32.mrb[0].mxu0
    %v993 = vpop.f32.mrb[0].mxu0
    %v994 = vadd.f32 0.0, %v993
    %v995 = vpop.f32.mrb[0].mxu0
    %996 = vmatprep.mubr.bf16.mxu0 0
    %997 = vmatmul.mubr.bf16.gmra.mrb[0].mxu0 %v890
    %v998 = vpop.f32.mrb[0].mxu0
    %v999 = vadd.f32 0.0, %v998
    %v1000 = vpop.f32.mrb[0].mxu0
    %v1001 = vpop.f32.mrb[0].mxu0
    %v1002 = vadd.f32 0.0, %v1001
    %v1003 = vpop.f32.mrb[0].mxu0
    %1004 = vdwg.mxu0
    %v1005 = vadd.f32 %v877, %v991
    %v1006 = vadd.f32 %v878, %v994
    %v1007 = vadd.f32 %v879, %v999
    %v1008 = vadd.f32 %v880, %v1002
    %1009 = vst [vmem:[#allocation2] sm:$0xff] %v1005
    %1010 = vst [vmem:[#allocation2 + $0x8] sm:$0xff] %v1006
    %1011 = vst [vmem:[#allocation2 + $0x10] sm:$0xff] %v1007
    %1012 = vst [vmem:[#allocation2 + $0x18] sm:$0xff] %v1008
    %v1013 = vrot.slane %v51, 6
    %v1014 = vrot.slane %v1013, 4
    %v1015 = vrot.slane %v867, 6
    %v1016 = vsel %vm389, %v1014, %v1015
    %v1017 = vrot.slane %v58, 6
    %v1018 = vrot.slane %v1017, 4
    %v1019 = vrot.slane %v868, 6
    %v1020 = vsel %vm389, %v1018, %v1019
    %v1021 = vld [vmem:[#allocation2] sm:$0xff]
    %v1022 = vld [vmem:[#allocation2 + $0x8] sm:$0xff]
    %v1023 = vld [vmem:[#allocation2 + $0x10] sm:$0xff]
    %v1024 = vld [vmem:[#allocation2 + $0x18] sm:$0xff]
    %v1025 = vcombine.low %v397, %v401
    %v1026 = vcombine.low %v405, %v1016
    %v1027 = vcombine.low %v413, %v417
    %v1028 = vcombine.low %v421, %v1020
    %v1033 = vpack.c.bf16 %v1026, %v1025
    %v1034 = vpack.c.bf16 %v1028, %v1027
    %s1035 = scalar_lea.vmem [#allocation3], 384
    %v1036 = vld [vmem:[%s1035] sm:$0xf]
    %v1037 = vld [vmem:[%s1035 + $0x4] sm:$0xf]
    %v1038 = vld [vmem:[%s1035 + $0x8] sm:$0xf]
    %v1039 = vld [vmem:[%s1035 + $0xc] sm:$0xf]
    %v1040 = vld [vmem:[%s1035 + $0x10] sm:$0xf]
    %v1041 = vld [vmem:[%s1035 + $0x14] sm:$0xf]
    %v1042 = vld [vmem:[%s1035 + $0x18] sm:$0xf]
    %v1043 = vld [vmem:[%s1035 + $0x1c] sm:$0xf]
    %v1044 = vld [vmem:[%s1035 + $0x20] sm:$0xf]
    %v1045 = vld [vmem:[%s1035 + $0x24] sm:$0xf]
    %v1046 = vld [vmem:[%s1035 + $0x28] sm:$0xf]
    %v1047 = vld [vmem:[%s1035 + $0x2c] sm:$0xf]
    %v1048 = vld [vmem:[%s1035 + $0x30] sm:$0xf]
    %v1049 = vld [vmem:[%s1035 + $0x34] sm:$0xf]
    %v1050 = vld [vmem:[%s1035 + $0x38] sm:$0xf]
    %v1051 = vld [vmem:[%s1035 + $0x3c] sm:$0xf]
    %v1068 = vunpack.c.l.b16 %v1036
    %v1069 = vunpack.c.l.b16 %v1037
    %v1070 = vunpack.c.l.b16 %v1038
    %v1071 = vunpack.c.l.b16 %v1039
    %v1072 = vunpack.c.l.b16 %v1040
    %v1073 = vunpack.c.l.b16 %v1041
    %v1074 = vunpack.c.l.b16 %v1042
    %v1075 = vunpack.c.l.b16 %v1043
    %v1076 = vunpack.c.l.b16 %v1044
    %v1077 = vunpack.c.l.b16 %v1045
    %v1078 = vunpack.c.l.b16 %v1046
    %v1079 = vunpack.c.l.b16 %v1047
    %v1080 = vunpack.c.l.b16 %v1048
    %v1081 = vunpack.c.l.b16 %v1049
    %v1082 = vunpack.c.l.b16 %v1050
    %v1083 = vunpack.c.l.b16 %v1051
    %v1084 = vpack.c.b16 %v1069, %v1068
    %v1085 = vpack.c.b16 %v1071, %v1070
    %v1086 = vpack.c.b16 %v1073, %v1072
    %v1087 = vpack.c.b16 %v1075, %v1074
    %v1088 = vpack.c.b16 %v1077, %v1076
    %v1089 = vpack.c.b16 %v1079, %v1078
    %v1090 = vpack.c.b16 %v1081, %v1080
    %v1091 = vpack.c.b16 %v1083, %v1082
    %1100 = vmatprep.subr.bf16.mxu0 0
    %1101 = vmatpush1.bf16.msra.mxu0 %v1084
    %1102 = vmatprep.subr.bf16.mxu0 0
    %1103 = vmatpush1.bf16.msra.mxu0 %v1085
    %1104 = vmatprep.subr.bf16.mxu0 0
    %1105 = vmatpush1.bf16.msra.mxu0 %v1086
    %1106 = vmatprep.subr.bf16.mxu0 0
    %1107 = vmatpush1.bf16.msra.mxu0 %v1087
    %1108 = vmatprep.subr.bf16.mxu0 0
    %1109 = vmatpush1.bf16.msra.mxu0 %v1088
    %1110 = vmatprep.subr.bf16.mxu0 0
    %1111 = vmatpush1.bf16.msra.mxu0 %v1089
    %1112 = vmatprep.subr.bf16.mxu0 0
    %1113 = vmatpush1.bf16.msra.mxu0 %v1090
    %1114 = vmatprep.subr.bf16.mxu0 0
    %1115 = vmatpush1.bf16.msra.mxu0 %v1091
    %1116 = vmatprep.subr.bf16.mxu0 0
    %1117 = vmatpush1.bf16.msra.mxu0 0
    %1118 = vmatprep.subr.bf16.mxu0 0
    %1119 = vmatpush1.bf16.msra.mxu0 0
    %1120 = vmatprep.subr.bf16.mxu0 0
    %1121 = vmatpush1.bf16.msra.mxu0 0
    %1122 = vmatprep.subr.bf16.mxu0 0
    %1123 = vmatpush1.bf16.msra.mxu0 0
    %1124 = vmatprep.subr.bf16.mxu0 0
    %1125 = vmatpush1.bf16.msra.mxu0 0
    %1126 = vmatprep.subr.bf16.mxu0 0
    %1127 = vmatpush1.bf16.msra.mxu0 0
    %1128 = vmatprep.subr.bf16.mxu0 0
    %1129 = vmatpush1.bf16.msra.mxu0 0
    %1130 = vmatprep.subr.bf16.mxu0 0
    %1131 = vmatpush1.bf16.msra.mxu0 0
    %1132 = vmatprep.mubr.bf16.mxu0 0
    %1133 = vmatmul.mubr.bf16.gmra.mrb[0].mxu0 %v1033
    %v1134 = vpop.f32.mrb[0].mxu0
    %v1135 = vadd.f32 0.0, %v1134
    %v1136 = vpop.f32.mrb[0].mxu0
    %v1137 = vpop.f32.mrb[0].mxu0
    %v1138 = vadd.f32 0.0, %v1137
    %v1139 = vpop.f32.mrb[0].mxu0
    %1140 = vmatprep.mubr.bf16.mxu0 0
    %1141 = vmatmul.mubr.bf16.gmra.mrb[0].mxu0 %v1034
    %v1142 = vpop.f32.mrb[0].mxu0
    %v1143 = vadd.f32 0.0, %v1142
    %v1144 = vpop.f32.mrb[0].mxu0
    %v1145 = vpop.f32.mrb[0].mxu0
    %v1146 = vadd.f32 0.0, %v1145
    %v1147 = vpop.f32.mrb[0].mxu0
    %1148 = vdwg.mxu0
    %v1149 = vadd.f32 %v1021, %v1135
    %v1150 = vadd.f32 %v1022, %v1138
    %v1151 = vadd.f32 %v1023, %v1143
    %v1152 = vadd.f32 %v1024, %v1146
    %1153 = vst [vmem:[#allocation2] sm:$0xff] %v1149
    %1154 = vst [vmem:[#allocation2 + $0x8] sm:$0xff] %v1150
    %1155 = vst [vmem:[#allocation2 + $0x10] sm:$0xff] %v1151
    %1156 = vst [vmem:[#allocation2 + $0x18] sm:$0xff] %v1152
    %v1157 = vrot.slane %v51, 7
    %v1158 = vrot.slane %v1157, 4
    %v1159 = vrot.slane %v867, 7
    %v1160 = vsel %vm560, %v1158, %v1159
    %v1161 = vrot.slane %v58, 7
    %v1162 = vrot.slane %v1161, 4
    %v1163 = vrot.slane %v868, 7
    %v1164 = vsel %vm560, %v1162, %v1163
    %v1165 = vld [vmem:[#allocation2] sm:$0xff]
    %v1166 = vld [vmem:[#allocation2 + $0x8] sm:$0xff]
    %v1167 = vld [vmem:[#allocation2 + $0x10] sm:$0xff]
    %v1168 = vld [vmem:[#allocation2 + $0x18] sm:$0xff]
    %v1169 = vcombine.low %v568, %v572
    %v1170 = vcombine.low %v576, %v1160
    %v1171 = vcombine.low %v584, %v588
    %v1172 = vcombine.low %v592, %v1164
    %v1177 = vpack.c.bf16 %v1170, %v1169
    %v1178 = vpack.c.bf16 %v1172, %v1171
    %s1179 = scalar_lea.vmem [#allocation3], 448
    %v1180 = vld [vmem:[%s1179] sm:$0xf]
    %v1181 = vld [vmem:[%s1179 + $0x4] sm:$0xf]
    %v1182 = vld [vmem:[%s1179 + $0x8] sm:$0xf]
    %v1183 = vld [vmem:[%s1179 + $0xc] sm:$0xf]
    %v1184 = vld [vmem:[%s1179 + $0x10] sm:$0xf]
    %v1185 = vld [vmem:[%s1179 + $0x14] sm:$0xf]
    %v1186 = vld [vmem:[%s1179 + $0x18] sm:$0xf]
    %v1187 = vld [vmem:[%s1179 + $0x1c] sm:$0xf]
    %v1188 = vld [vmem:[%s1179 + $0x20] sm:$0xf]
    %v1189 = vld [vmem:[%s1179 + $0x24] sm:$0xf]
    %v1190 = vld [vmem:[%s1179 + $0x28] sm:$0xf]
    %v1191 = vld [vmem:[%s1179 + $0x2c] sm:$0xf]
    %v1192 = vld [vmem:[%s1179 + $0x30] sm:$0xf]
    %v1193 = vld [vmem:[%s1179 + $0x34] sm:$0xf]
    %v1194 = vld [vmem:[%s1179 + $0x38] sm:$0xf]
    %v1195 = vld [vmem:[%s1179 + $0x3c] sm:$0xf]
    %v1212 = vunpack.c.l.b16 %v1180
    %v1213 = vunpack.c.l.b16 %v1181
    %v1214 = vunpack.c.l.b16 %v1182
    %v1215 = vunpack.c.l.b16 %v1183
    %v1216 = vunpack.c.l.b16 %v1184
    %v1217 = vunpack.c.l.b16 %v1185
    %v1218 = vunpack.c.l.b16 %v1186
    %v1219 = vunpack.c.l.b16 %v1187
    %v1220 = vunpack.c.l.b16 %v1188
    %v1221 = vunpack.c.l.b16 %v1189
    %v1222 = vunpack.c.l.b16 %v1190
    %v1223 = vunpack.c.l.b16 %v1191
    %v1224 = vunpack.c.l.b16 %v1192
    %v1225 = vunpack.c.l.b16 %v1193
    %v1226 = vunpack.c.l.b16 %v1194
    %v1227 = vunpack.c.l.b16 %v1195
    %v1228 = vpack.c.b16 %v1213, %v1212
    %v1229 = vpack.c.b16 %v1215, %v1214
    %v1230 = vpack.c.b16 %v1217, %v1216
    %v1231 = vpack.c.b16 %v1219, %v1218
    %v1232 = vpack.c.b16 %v1221, %v1220
    %v1233 = vpack.c.b16 %v1223, %v1222
    %v1234 = vpack.c.b16 %v1225, %v1224
    %v1235 = vpack.c.b16 %v1227, %v1226
    %1244 = vmatprep.subr.bf16.mxu0 0
    %1245 = vmatpush1.bf16.msra.mxu0 %v1228
    %1246 = vmatprep.subr.bf16.mxu0 0
    %1247 = vmatpush1.bf16.msra.mxu0 %v1229
    %1248 = vmatprep.subr.bf16.mxu0 0
    %1249 = vmatpush1.bf16.msra.mxu0 %v1230
    %1250 = vmatprep.subr.bf16.mxu0 0
    %1251 = vmatpush1.bf16.msra.mxu0 %v1231
    %1252 = vmatprep.subr.bf16.mxu0 0
    %1253 = vmatpush1.bf16.msra.mxu0 %v1232
    %1254 = vmatprep.subr.bf16.mxu0 0
    %1255 = vmatpush1.bf16.msra.mxu0 %v1233
    %1256 = vmatprep.subr.bf16.mxu0 0
    %1257 = vmatpush1.bf16.msra.mxu0 %v1234
    %1258 = vmatprep.subr.bf16.mxu0 0
    %1259 = vmatpush1.bf16.msra.mxu0 %v1235
    %1260 = vmatprep.subr.bf16.mxu0 0
    %1261 = vmatpush1.bf16.msra.mxu0 0
    %1262 = vmatprep.subr.bf16.mxu0 0
    %1263 = vmatpush1.bf16.msra.mxu0 0
    %1264 = vmatprep.subr.bf16.mxu0 0
    %1265 = vmatpush1.bf16.msra.mxu0 0
    %1266 = vmatprep.subr.bf16.mxu0 0
    %1267 = vmatpush1.bf16.msra.mxu0 0
    %1268 = vmatprep.subr.bf16.mxu0 0
    %1269 = vmatpush1.bf16.msra.mxu0 0
    %1270 = vmatprep.subr.bf16.mxu0 0
    %1271 = vmatpush1.bf16.msra.mxu0 0
    %1272 = vmatprep.subr.bf16.mxu0 0
    %1273 = vmatpush1.bf16.msra.mxu0 0
    %1274 = vmatprep.subr.bf16.mxu0 0
    %1275 = vmatpush1.bf16.msra.mxu0 0
    %1276 = vmatprep.mubr.bf16.mxu0 0
    %1277 = vmatmul.mubr.bf16.gmra.mrb[0].mxu0 %v1177
    %v1278 = vpop.f32.mrb[0].mxu0
    %v1279 = vadd.f32 0.0, %v1278
    %v1280 = vpop.f32.mrb[0].mxu0
    %v1281 = vpop.f32.mrb[0].mxu0
    %v1282 = vadd.f32 0.0, %v1281
    %v1283 = vpop.f32.mrb[0].mxu0
    %1284 = vmatprep.mubr.bf16.mxu0 0
    %1285 = vmatmul.mubr.bf16.gmra.mrb[0].mxu0 %v1178
    %v1286 = vpop.f32.mrb[0].mxu0
    %v1287 = vadd.f32 0.0, %v1286
    %v1288 = vpop.f32.mrb[0].mxu0
    %v1289 = vpop.f32.mrb[0].mxu0
    %v1290 = vadd.f32 0.0, %v1289
    %v1291 = vpop.f32.mrb[0].mxu0
    %1292 = vdwg.mxu0
    %v1293 = vadd.f32 %v1165, %v1279
    %v1294 = vadd.f32 %v1166, %v1282
    %v1295 = vadd.f32 %v1167, %v1287
    %v1296 = vadd.f32 %v1168, %v1290
    %1297 = vst [vmem:[#allocation2] sm:$0xff] %v1293
    %1298 = vst [vmem:[#allocation2 + $0x8] sm:$0xff] %v1294
    %1299 = vst [vmem:[#allocation2 + $0x10] sm:$0xff] %v1295
    %1300 = vst [vmem:[#allocation2 + $0x18] sm:$0xff] %v1296
    %v1301 = vld [vmem:[#allocation2] sm:$0xff]
    %v1302 = vld [vmem:[#allocation2 + $0x8] sm:$0xff]
    %v1303 = vld [vmem:[#allocation2 + $0x10] sm:$0xff]
    %v1304 = vld [vmem:[#allocation2 + $0x18] sm:$0xff]
    %v1307 = vcombine.low %v51, %v52
    %v1308 = vcombine.low %v58, %v59
    %v1311 = vpack.c.bf16 %v1307, %v78
    %v1312 = vpack.c.bf16 %v1308, %v80
    %s1313 = scalar_lea.vmem [#allocation3], 512
    %v1314 = vld [vmem:[%s1313] sm:$0xf]
    %v1315 = vld [vmem:[%s1313 + $0x4] sm:$0xf]
    %v1316 = vld [vmem:[%s1313 + $0x8] sm:$0xf]
    %v1317 = vld [vmem:[%s1313 + $0xc] sm:$0xf]
    %v1318 = vld [vmem:[%s1313 + $0x10] sm:$0xf]
    %v1319 = vld [vmem:[%s1313 + $0x14] sm:$0xf]
    %v1320 = vld [vmem:[%s1313 + $0x18] sm:$0xf]
    %v1321 = vld [vmem:[%s1313 + $0x1c] sm:$0xf]
    %v1322 = vld [vmem:[%s1313 + $0x20] sm:$0xf]
    %v1323 = vld [vmem:[%s1313 + $0x24] sm:$0xf]
    %v1324 = vld [vmem:[%s1313 + $0x28] sm:$0xf]
    %v1325 = vld [vmem:[%s1313 + $0x2c] sm:$0xf]
    %v1326 = vld [vmem:[%s1313 + $0x30] sm:$0xf]
    %v1327 = vld [vmem:[%s1313 + $0x34] sm:$0xf]
    %v1328 = vld [vmem:[%s1313 + $0x38] sm:$0xf]
    %v1329 = vld [vmem:[%s1313 + $0x3c] sm:$0xf]
    %v1346 = vunpack.c.l.b16 %v1314
    %v1347 = vunpack.c.l.b16 %v1315
    %v1348 = vunpack.c.l.b16 %v1316
    %v1349 = vunpack.c.l.b16 %v1317
    %v1350 = vunpack.c.l.b16 %v1318
    %v1351 = vunpack.c.l.b16 %v1319
    %v1352 = vunpack.c.l.b16 %v1320
    %v1353 = vunpack.c.l.b16 %v1321
    %v1354 = vunpack.c.l.b16 %v1322
    %v1355 = vunpack.c.l.b16 %v1323
    %v1356 = vunpack.c.l.b16 %v1324
    %v1357 = vunpack.c.l.b16 %v1325
    %v1358 = vunpack.c.l.b16 %v1326
    %v1359 = vunpack.c.l.b16 %v1327
    %v1360 = vunpack.c.l.b16 %v1328
    %v1361 = vunpack.c.l.b16 %v1329
    %v1362 = vpack.c.b16 %v1347, %v1346
    %v1363 = vpack.c.b16 %v1349, %v1348
    %v1364 = vpack.c.b16 %v1351, %v1350
    %v1365 = vpack.c.b16 %v1353, %v1352
    %v1366 = vpack.c.b16 %v1355, %v1354
    %v1367 = vpack.c.b16 %v1357, %v1356
    %v1368 = vpack.c.b16 %v1359, %v1358
    %v1369 = vpack.c.b16 %v1361, %v1360
    %1378 = vmatprep.subr.bf16.mxu0 0
    %1379 = vmatpush1.bf16.msra.mxu0 %v1362
    %1380 = vmatprep.subr.bf16.mxu0 0
    %1381 = vmatpush1.bf16.msra.mxu0 %v1363
    %1382 = vmatprep.subr.bf16.mxu0 0
    %1383 = vmatpush1.bf16.msra.mxu0 %v1364
    %1384 = vmatprep.subr.bf16.mxu0 0
    %1385 = vmatpush1.bf16.msra.mxu0 %v1365
    %1386 = vmatprep.subr.bf16.mxu0 0
    %1387 = vmatpush1.bf16.msra.mxu0 %v1366
    %1388 = vmatprep.subr.bf16.mxu0 0
    %1389 = vmatpush1.bf16.msra.mxu0 %v1367
    %1390 = vmatprep.subr.bf16.mxu0 0
    %1391 = vmatpush1.bf16.msra.mxu0 %v1368
    %1392 = vmatprep.subr.bf16.mxu0 0
    %1393 = vmatpush1.bf16.msra.mxu0 %v1369
    %1394 = vmatprep.subr.bf16.mxu0 0
    %1395 = vmatpush1.bf16.msra.mxu0 0
    %1396 = vmatprep.subr.bf16.mxu0 0
    %1397 = vmatpush1.bf16.msra.mxu0 0
    %1398 = vmatprep.subr.bf16.mxu0 0
    %1399 = vmatpush1.bf16.msra.mxu0 0
    %1400 = vmatprep.subr.bf16.mxu0 0
    %1401 = vmatpush1.bf16.msra.mxu0 0
    %1402 = vmatprep.subr.bf16.mxu0 0
    %1403 = vmatpush1.bf16.msra.mxu0 0
    %1404 = vmatprep.subr.bf16.mxu0 0
    %1405 = vmatpush1.bf16.msra.mxu0 0
    %1406 = vmatprep.subr.bf16.mxu0 0
    %1407 = vmatpush1.bf16.msra.mxu0 0
    %1408 = vmatprep.subr.bf16.mxu0 0
    %1409 = vmatpush1.bf16.msra.mxu0 0
    %1410 = vmatprep.mubr.bf16.mxu0 0
    %1411 = vmatmul.mubr.bf16.gmra.mrb[0].mxu0 %v1311
    %v1412 = vpop.f32.mrb[0].mxu0
    %v1413 = vadd.f32 0.0, %v1412
    %v1414 = vpop.f32.mrb[0].mxu0
    %v1415 = vpop.f32.mrb[0].mxu0
    %v1416 = vadd.f32 0.0, %v1415
    %v1417 = vpop.f32.mrb[0].mxu0
    %1418 = vmatprep.mubr.bf16.mxu0 0
    %1419 = vmatmul.mubr.bf16.gmra.mrb[0].mxu0 %v1312
    %v1420 = vpop.f32.mrb[0].mxu0
    %v1421 = vadd.f32 0.0, %v1420
    %v1422 = vpop.f32.mrb[0].mxu0
    %v1423 = vpop.f32.mrb[0].mxu0
    %v1424 = vadd.f32 0.0, %v1423
    %v1425 = vpop.f32.mrb[0].mxu0
    %1426 = vdwg.mxu0
    %v1427 = vadd.f32 %v1301, %v1413
    %v1428 = vadd.f32 %v1302, %v1416
    %v1429 = vadd.f32 %v1303, %v1421
    %v1430 = vadd.f32 %v1304, %v1424
    %1431 = vst [vmem:[#allocation2] sm:$0xff] %v1427
    %1432 = vst [vmem:[#allocation2 + $0x8] sm:$0xff] %v1428
    %1433 = vst [vmem:[#allocation2 + $0x10] sm:$0xff] %v1429
    %1434 = vst [vmem:[#allocation2 + $0x18] sm:$0xff] %v1430
    %v1435 = vcombine.high %v52, %v52
    %v1436 = vcombine.high %v59, %v59
    %v1437 = vrot.slane %v52, 5
    %v1438 = vrot.slane %v1437, 4
    %v1439 = vrot.slane %v1435, 5
    %v1440 = vsel %vm218, %v1438, %v1439
    %v1441 = vrot.slane %v59, 5
    %v1442 = vrot.slane %v1441, 4
    %v1443 = vrot.slane %v1436, 5
    %v1444 = vsel %vm218, %v1442, %v1443
    %v1445 = vld [vmem:[#allocation2] sm:$0xff]
    %v1446 = vld [vmem:[#allocation2 + $0x8] sm:$0xff]
    %v1447 = vld [vmem:[#allocation2 + $0x10] sm:$0xff]
    %v1448 = vld [vmem:[#allocation2 + $0x18] sm:$0xff]
    %v1449 = vcombine.low %v872, %v1440
    %v1450 = vcombine.low %v876, %v1444
    %v1453 = vpack.c.bf16 %v1449, %v256
    %v1454 = vpack.c.bf16 %v1450, %v258
    %s1455 = scalar_lea.vmem [#allocation3], 576
    %v1456 = vld [vmem:[%s1455] sm:$0xf]
    %v1457 = vld [vmem:[%s1455 + $0x4] sm:$0xf]
    %v1458 = vld [vmem:[%s1455 + $0x8] sm:$0xf]
    %v1459 = vld [vmem:[%s1455 + $0xc] sm:$0xf]
    %v1460 = vld [vmem:[%s1455 + $0x10] sm:$0xf]
    %v1461 = vld [vmem:[%s1455 + $0x14] sm:$0xf]
    %v1462 = vld [vmem:[%s1455 + $0x18] sm:$0xf]
    %v1463 = vld [vmem:[%s1455 + $0x1c] sm:$0xf]
    %v1464 = vld [vmem:[%s1455 + $0x20] sm:$0xf]
    %v1465 = vld [vmem:[%s1455 + $0x24] sm:$0xf]
    %v1466 = vld [vmem:[%s1455 + $0x28] sm:$0xf]
    %v1467 = vld [vmem:[%s1455 + $0x2c] sm:$0xf]
    %v1468 = vld [vmem:[%s1455 + $0x30] sm:$0xf]
    %v1469 = vld [vmem:[%s1455 + $0x34] sm:$0xf]
    %v1470 = vld [vmem:[%s1455 + $0x38] sm:$0xf]
    %v1471 = vld [vmem:[%s1455 + $0x3c] sm:$0xf]
    %v1488 = vunpack.c.l.b16 %v1456
    %v1489 = vunpack.c.l.b16 %v1457
    %v1490 = vunpack.c.l.b16 %v1458
    %v1491 = vunpack.c.l.b16 %v1459
    %v1492 = vunpack.c.l.b16 %v1460
    %v1493 = vunpack.c.l.b16 %v1461
    %v1494 = vunpack.c.l.b16 %v1462
    %v1495 = vunpack.c.l.b16 %v1463
    %v1496 = vunpack.c.l.b16 %v1464
    %v1497 = vunpack.c.l.b16 %v1465
    %v1498 = vunpack.c.l.b16 %v1466
    %v1499 = vunpack.c.l.b16 %v1467
    %v1500 = vunpack.c.l.b16 %v1468
    %v1501 = vunpack.c.l.b16 %v1469
    %v1502 = vunpack.c.l.b16 %v1470
    %v1503 = vunpack.c.l.b16 %v1471
    %v1504 = vpack.c.b16 %v1489, %v1488
    %v1505 = vpack.c.b16 %v1491, %v1490
    %v1506 = vpack.c.b16 %v1493, %v1492
    %v1507 = vpack.c.b16 %v1495, %v1494
    %v1508 = vpack.c.b16 %v1497, %v1496
    %v1509 = vpack.c.b16 %v1499, %v1498
    %v1510 = vpack.c.b16 %v1501, %v1500
    %v1511 = vpack.c.b16 %v1503, %v1502
    %1520 = vmatprep.subr.bf16.mxu0 0
    %1521 = vmatpush1.bf16.msra.mxu0 %v1504
    %1522 = vmatprep.subr.bf16.mxu0 0
    %1523 = vmatpush1.bf16.msra.mxu0 %v1505
    %1524 = vmatprep.subr.bf16.mxu0 0
    %1525 = vmatpush1.bf16.msra.mxu0 %v1506
    %1526 = vmatprep.subr.bf16.mxu0 0
    %1527 = vmatpush1.bf16.msra.mxu0 %v1507
    %1528 = vmatprep.subr.bf16.mxu0 0
    %1529 = vmatpush1.bf16.msra.mxu0 %v1508
    %1530 = vmatprep.subr.bf16.mxu0 0
    %1531 = vmatpush1.bf16.msra.mxu0 %v1509
    %1532 = vmatprep.subr.bf16.mxu0 0
    %1533 = vmatpush1.bf16.msra.mxu0 %v1510
    %1534 = vmatprep.subr.bf16.mxu0 0
    %1535 = vmatpush1.bf16.msra.mxu0 %v1511
    %1536 = vmatprep.subr.bf16.mxu0 0
    %1537 = vmatpush1.bf16.msra.mxu0 0
    %1538 = vmatprep.subr.bf16.mxu0 0
    %1539 = vmatpush1.bf16.msra.mxu0 0
    %1540 = vmatprep.subr.bf16.mxu0 0
    %1541 = vmatpush1.bf16.msra.mxu0 0
    %1542 = vmatprep.subr.bf16.mxu0 0
    %1543 = vmatpush1.bf16.msra.mxu0 0
    %1544 = vmatprep.subr.bf16.mxu0 0
    %1545 = vmatpush1.bf16.msra.mxu0 0
    %1546 = vmatprep.subr.bf16.mxu0 0
    %1547 = vmatpush1.bf16.msra.mxu0 0
    %1548 = vmatprep.subr.bf16.mxu0 0
    %1549 = vmatpush1.bf16.msra.mxu0 0
    %1550 = vmatprep.subr.bf16.mxu0 0
    %1551 = vmatpush1.bf16.msra.mxu0 0
    %1552 = vmatprep.mubr.bf16.mxu0 0
    %1553 = vmatmul.mubr.bf16.gmra.mrb[0].mxu0 %v1453
    %v1554 = vpop.f32.mrb[0].mxu0
    %v1555 = vadd.f32 0.0, %v1554
    %v1556 = vpop.f32.mrb[0].mxu0
    %v1557 = vpop.f32.mrb[0].mxu0
    %v1558 = vadd.f32 0.0, %v1557
    %v1559 = vpop.f32.mrb[0].mxu0
    %1560 = vmatprep.mubr.bf16.mxu0 0
    %1561 = vmatmul.mubr.bf16.gmra.mrb[0].mxu0 %v1454
    %v1562 = vpop.f32.mrb[0].mxu0
    %v1563 = vadd.f32 0.0, %v1562
    %v1564 = vpop.f32.mrb[0].mxu0
    %v1565 = vpop.f32.mrb[0].mxu0
    %v1566 = vadd.f32 0.0, %v1565
    %v1567 = vpop.f32.mrb[0].mxu0
    %1568 = vdwg.mxu0
    %v1569 = vadd.f32 %v1445, %v1555
    %v1570 = vadd.f32 %v1446, %v1558
    %v1571 = vadd.f32 %v1447, %v1563
    %v1572 = vadd.f32 %v1448, %v1566
    %1573 = vst [vmem:[#allocation2] sm:$0xff] %v1569
    %1574 = vst [vmem:[#allocation2 + $0x8] sm:$0xff] %v1570
    %1575 = vst [vmem:[#allocation2 + $0x10] sm:$0xff] %v1571
    %1576 = vst [vmem:[#allocation2 + $0x18] sm:$0xff] %v1572
    %v1577 = vrot.slane %v52, 6
    %v1578 = vrot.slane %v1577, 4
    %v1579 = vrot.slane %v1435, 6
    %v1580 = vsel %vm389, %v1578, %v1579
    %v1581 = vrot.slane %v59, 6
    %v1582 = vrot.slane %v1581, 4
    %v1583 = vrot.slane %v1436, 6
    %v1584 = vsel %vm389, %v1582, %v1583
    %v1585 = vld [vmem:[#allocation2] sm:$0xff]
    %v1586 = vld [vmem:[#allocation2 + $0x8] sm:$0xff]
    %v1587 = vld [vmem:[#allocation2 + $0x10] sm:$0xff]
    %v1588 = vld [vmem:[#allocation2 + $0x18] sm:$0xff]
    %v1589 = vcombine.low %v1016, %v1580
    %v1590 = vcombine.low %v1020, %v1584
    %v1593 = vpack.c.bf16 %v1589, %v427
    %v1594 = vpack.c.bf16 %v1590, %v429
    %s1595 = scalar_lea.vmem [#allocation3], 640
    %v1596 = vld [vmem:[%s1595] sm:$0xf]
    %v1597 = vld [vmem:[%s1595 + $0x4] sm:$0xf]
    %v1598 = vld [vmem:[%s1595 + $0x8] sm:$0xf]
    %v1599 = vld [vmem:[%s1595 + $0xc] sm:$0xf]
    %v1600 = vld [vmem:[%s1595 + $0x10] sm:$0xf]
    %v1601 = vld [vmem:[%s1595 + $0x14] sm:$0xf]
    %v1602 = vld [vmem:[%s1595 + $0x18] sm:$0xf]
    %v1603 = vld [vmem:[%s1595 + $0x1c] sm:$0xf]
    %v1604 = vld [vmem:[%s1595 + $0x20] sm:$0xf]
    %v1605 = vld [vmem:[%s1595 + $0x24] sm:$0xf]
    %v1606 = vld [vmem:[%s1595 + $0x28] sm:$0xf]
    %v1607 = vld [vmem:[%s1595 + $0x2c] sm:$0xf]
    %v1608 = vld [vmem:[%s1595 + $0x30] sm:$0xf]
    %v1609 = vld [vmem:[%s1595 + $0x34] sm:$0xf]
    %v1610 = vld [vmem:[%s1595 + $0x38] sm:$0xf]
    %v1611 = vld [vmem:[%s1595 + $0x3c] sm:$0xf]
    %v1628 = vunpack.c.l.b16 %v1596
    %v1629 = vunpack.c.l.b16 %v1597
    %v1630 = vunpack.c.l.b16 %v1598
    %v1631 = vunpack.c.l.b16 %v1599
    %v1632 = vunpack.c.l.b16 %v1600
    %v1633 = vunpack.c.l.b16 %v1601
    %v1634 = vunpack.c.l.b16 %v1602
    %v1635 = vunpack.c.l.b16 %v1603
    %v1636 = vunpack.c.l.b16 %v1604
    %v1637 = vunpack.c.l.b16 %v1605
    %v1638 = vunpack.c.l.b16 %v1606
    %v1639 = vunpack.c.l.b16 %v1607
    %v1640 = vunpack.c.l.b16 %v1608
    %v1641 = vunpack.c.l.b16 %v1609
    %v1642 = vunpack.c.l.b16 %v1610
    %v1643 = vunpack.c.l.b16 %v1611
    %v1644 = vpack.c.b16 %v1629, %v1628
    %v1645 = vpack.c.b16 %v1631, %v1630
    %v1646 = vpack.c.b16 %v1633, %v1632
    %v1647 = vpack.c.b16 %v1635, %v1634
    %v1648 = vpack.c.b16 %v1637, %v1636
    %v1649 = vpack.c.b16 %v1639, %v1638
    %v1650 = vpack.c.b16 %v1641, %v1640
    %v1651 = vpack.c.b16 %v1643, %v1642
    %1660 = vmatprep.subr.bf16.mxu0 0
    %1661 = vmatpush1.bf16.msra.mxu0 %v1644
    %1662 = vmatprep.subr.bf16.mxu0 0
    %1663 = vmatpush1.bf16.msra.mxu0 %v1645
    %1664 = vmatprep.subr.bf16.mxu0 0
    %1665 = vmatpush1.bf16.msra.mxu0 %v1646
    %1666 = vmatprep.subr.bf16.mxu0 0
    %1667 = vmatpush1.bf16.msra.mxu0 %v1647
    %1668 = vmatprep.subr.bf16.mxu0 0
    %1669 = vmatpush1.bf16.msra.mxu0 %v1648
    %1670 = vmatprep.subr.bf16.mxu0 0
    %1671 = vmatpush1.bf16.msra.mxu0 %v1649
    %1672 = vmatprep.subr.bf16.mxu0 0
    %1673 = vmatpush1.bf16.msra.mxu0 %v1650
    %1674 = vmatprep.subr.bf16.mxu0 0
    %1675 = vmatpush1.bf16.msra.mxu0 %v1651
    %1676 = vmatprep.subr.bf16.mxu0 0
    %1677 = vmatpush1.bf16.msra.mxu0 0
    %1678 = vmatprep.subr.bf16.mxu0 0
    %1679 = vmatpush1.bf16.msra.mxu0 0
    %1680 = vmatprep.subr.bf16.mxu0 0
    %1681 = vmatpush1.bf16.msra.mxu0 0
    %1682 = vmatprep.subr.bf16.mxu0 0
    %1683 = vmatpush1.bf16.msra.mxu0 0
    %1684 = vmatprep.subr.bf16.mxu0 0
    %1685 = vmatpush1.bf16.msra.mxu0 0
    %1686 = vmatprep.subr.bf16.mxu0 0
    %1687 = vmatpush1.bf16.msra.mxu0 0
    %1688 = vmatprep.subr.bf16.mxu0 0
    %1689 = vmatpush1.bf16.msra.mxu0 0
    %1690 = vmatprep.subr.bf16.mxu0 0
    %1691 = vmatpush1.bf16.msra.mxu0 0
    %1692 = vmatprep.mubr.bf16.mxu0 0
    %1693 = vmatmul.mubr.bf16.gmra.mrb[0].mxu0 %v1593
    %v1694 = vpop.f32.mrb[0].mxu0
    %v1695 = vadd.f32 0.0, %v1694
    %v1696 = vpop.f32.mrb[0].mxu0
    %v1697 = vpop.f32.mrb[0].mxu0
    %v1698 = vadd.f32 0.0, %v1697
    %v1699 = vpop.f32.mrb[0].mxu0
    %1700 = vmatprep.mubr.bf16.mxu0 0
    %1701 = vmatmul.mubr.bf16.gmra.mrb[0].mxu0 %v1594
    %v1702 = vpop.f32.mrb[0].mxu0
    %v1703 = vadd.f32 0.0, %v1702
    %v1704 = vpop.f32.mrb[0].mxu0
    %v1705 = vpop.f32.mrb[0].mxu0
    %v1706 = vadd.f32 0.0, %v1705
    %v1707 = vpop.f32.mrb[0].mxu0
    %1708 = vdwg.mxu0
    %v1709 = vadd.f32 %v1585, %v1695
    %v1710 = vadd.f32 %v1586, %v1698
    %v1711 = vadd.f32 %v1587, %v1703
    %v1712 = vadd.f32 %v1588, %v1706
    %1713 = vst [vmem:[#allocation2] sm:$0xff] %v1709
    %1714 = vst [vmem:[#allocation2 + $0x8] sm:$0xff] %v1710
    %1715 = vst [vmem:[#allocation2 + $0x10] sm:$0xff] %v1711
    %1716 = vst [vmem:[#allocation2 + $0x18] sm:$0xff] %v1712
    %v1717 = vrot.slane %v52, 7
    %v1718 = vrot.slane %v1717, 4
    %v1719 = vrot.slane %v1435, 7
    %v1720 = vsel %vm560, %v1718, %v1719
    %v1721 = vrot.slane %v59, 7
    %v1722 = vrot.slane %v1721, 4
    %v1723 = vrot.slane %v1436, 7
    %v1724 = vsel %vm560, %v1722, %v1723
    %v1725 = vld [vmem:[#allocation2] sm:$0xff]
    %v1726 = vld [vmem:[#allocation2 + $0x8] sm:$0xff]
    %v1727 = vld [vmem:[#allocation2 + $0x10] sm:$0xff]
    %v1728 = vld [vmem:[#allocation2 + $0x18] sm:$0xff]
    %v1729 = vcombine.low %v1160, %v1720
    %v1730 = vcombine.low %v1164, %v1724
    %v1733 = vpack.c.bf16 %v1729, %v598
    %v1734 = vpack.c.bf16 %v1730, %v600
    %s1735 = scalar_lea.vmem [#allocation3], 704
    %v1736 = vld [vmem:[%s1735] sm:$0xf]
    %v1737 = vld [vmem:[%s1735 + $0x4] sm:$0xf]
    %v1738 = vld [vmem:[%s1735 + $0x8] sm:$0xf]
    %v1739 = vld [vmem:[%s1735 + $0xc] sm:$0xf]
    %v1740 = vld [vmem:[%s1735 + $0x10] sm:$0xf]
    %v1741 = vld [vmem:[%s1735 + $0x14] sm:$0xf]
    %v1742 = vld [vmem:[%s1735 + $0x18] sm:$0xf]
    %v1743 = vld [vmem:[%s1735 + $0x1c] sm:$0xf]
    %v1744 = vld [vmem:[%s1735 + $0x20] sm:$0xf]
    %v1745 = vld [vmem:[%s1735 + $0x24] sm:$0xf]
    %v1746 = vld [vmem:[%s1735 + $0x28] sm:$0xf]
    %v1747 = vld [vmem:[%s1735 + $0x2c] sm:$0xf]
    %v1748 = vld [vmem:[%s1735 + $0x30] sm:$0xf]
    %v1749 = vld [vmem:[%s1735 + $0x34] sm:$0xf]
    %v1750 = vld [vmem:[%s1735 + $0x38] sm:$0xf]
    %v1751 = vld [vmem:[%s1735 + $0x3c] sm:$0xf]
    %v1768 = vunpack.c.l.b16 %v1736
    %v1769 = vunpack.c.l.b16 %v1737
    %v1770 = vunpack.c.l.b16 %v1738
    %v1771 = vunpack.c.l.b16 %v1739
    %v1772 = vunpack.c.l.b16 %v1740
    %v1773 = vunpack.c.l.b16 %v1741
    %v1774 = vunpack.c.l.b16 %v1742
    %v1775 = vunpack.c.l.b16 %v1743
    %v1776 = vunpack.c.l.b16 %v1744
    %v1777 = vunpack.c.l.b16 %v1745
    %v1778 = vunpack.c.l.b16 %v1746
    %v1779 = vunpack.c.l.b16 %v1747
    %v1780 = vunpack.c.l.b16 %v1748
    %v1781 = vunpack.c.l.b16 %v1749
    %v1782 = vunpack.c.l.b16 %v1750
    %v1783 = vunpack.c.l.b16 %v1751
    %v1784 = vpack.c.b16 %v1769, %v1768
    %v1785 = vpack.c.b16 %v1771, %v1770
    %v1786 = vpack.c.b16 %v1773, %v1772
    %v1787 = vpack.c.b16 %v1775, %v1774
    %v1788 = vpack.c.b16 %v1777, %v1776
    %v1789 = vpack.c.b16 %v1779, %v1778
    %v1790 = vpack.c.b16 %v1781, %v1780
    %v1791 = vpack.c.b16 %v1783, %v1782
    %1800 = vmatprep.subr.bf16.mxu0 0
    %1801 = vmatpush1.bf16.msra.mxu0 %v1784
    %1802 = vmatprep.subr.bf16.mxu0 0
    %1803 = vmatpush1.bf16.msra.mxu0 %v1785
    %1804 = vmatprep.subr.bf16.mxu0 0
    %1805 = vmatpush1.bf16.msra.mxu0 %v1786
    %1806 = vmatprep.subr.bf16.mxu0 0
    %1807 = vmatpush1.bf16.msra.mxu0 %v1787
    %1808 = vmatprep.subr.bf16.mxu0 0
    %1809 = vmatpush1.bf16.msra.mxu0 %v1788
    %1810 = vmatprep.subr.bf16.mxu0 0
    %1811 = vmatpush1.bf16.msra.mxu0 %v1789
    %1812 = vmatprep.subr.bf16.mxu0 0
    %1813 = vmatpush1.bf16.msra.mxu0 %v1790
    %1814 = vmatprep.subr.bf16.mxu0 0
    %1815 = vmatpush1.bf16.msra.mxu0 %v1791
    %1816 = vmatprep.subr.bf16.mxu0 0
    %1817 = vmatpush1.bf16.msra.mxu0 0
    %1818 = vmatprep.subr.bf16.mxu0 0
    %1819 = vmatpush1.bf16.msra.mxu0 0
    %1820 = vmatprep.subr.bf16.mxu0 0
    %1821 = vmatpush1.bf16.msra.mxu0 0
    %1822 = vmatprep.subr.bf16.mxu0 0
    %1823 = vmatpush1.bf16.msra.mxu0 0
    %1824 = vmatprep.subr.bf16.mxu0 0
    %1825 = vmatpush1.bf16.msra.mxu0 0
    %1826 = vmatprep.subr.bf16.mxu0 0
    %1827 = vmatpush1.bf16.msra.mxu0 0
    %1828 = vmatprep.subr.bf16.mxu0 0
    %1829 = vmatpush1.bf16.msra.mxu0 0
    %1830 = vmatprep.subr.bf16.mxu0 0
    %1831 = vmatpush1.bf16.msra.mxu0 0
    %1832 = vmatprep.mubr.bf16.mxu0 0
    %1833 = vmatmul.mubr.bf16.gmra.mrb[0].mxu0 %v1733
    %v1834 = vpop.f32.mrb[0].mxu0
    %v1835 = vadd.f32 0.0, %v1834
    %v1836 = vpop.f32.mrb[0].mxu0
    %v1837 = vpop.f32.mrb[0].mxu0
    %v1838 = vadd.f32 0.0, %v1837
    %v1839 = vpop.f32.mrb[0].mxu0
    %1840 = vmatprep.mubr.bf16.mxu0 0
    %1841 = vmatmul.mubr.bf16.gmra.mrb[0].mxu0 %v1734
    %v1842 = vpop.f32.mrb[0].mxu0
    %v1843 = vadd.f32 0.0, %v1842
    %v1844 = vpop.f32.mrb[0].mxu0
    %v1845 = vpop.f32.mrb[0].mxu0
    %v1846 = vadd.f32 0.0, %v1845
    %v1847 = vpop.f32.mrb[0].mxu0
    %1848 = vdwg.mxu0
    %v1849 = vadd.f32 %v1725, %v1835
    %v1850 = vadd.f32 %v1726, %v1838
    %v1851 = vadd.f32 %v1727, %v1843
    %v1852 = vadd.f32 %v1728, %v1846
    %1853 = vst [vmem:[#allocation2] sm:$0xff] %v1849
    %1854 = vst [vmem:[#allocation2 + $0x8] sm:$0xff] %v1850
    %1855 = vst [vmem:[#allocation2 + $0x10] sm:$0xff] %v1851
    %1856 = vst [vmem:[#allocation2 + $0x18] sm:$0xff] %v1852
    %v1857 = vld [vmem:[#allocation2] sm:$0xff]
    %v1858 = vld [vmem:[#allocation2 + $0x8] sm:$0xff]
    %v1859 = vld [vmem:[#allocation2 + $0x10] sm:$0xff]
    %v1860 = vld [vmem:[#allocation2 + $0x18] sm:$0xff]
    %v1863 = vcombine.low %v52, %v53
    %v1864 = vcombine.low %v59, %v60
    %v1867 = vpack.c.bf16 %v1863, %v736
    %v1868 = vpack.c.bf16 %v1864, %v738
    %s1869 = scalar_lea.vmem [#allocation3], 768
    %v1870 = vld [vmem:[%s1869] sm:$0xf]
    %v1871 = vld [vmem:[%s1869 + $0x4] sm:$0xf]
    %v1872 = vld [vmem:[%s1869 + $0x8] sm:$0xf]
    %v1873 = vld [vmem:[%s1869 + $0xc] sm:$0xf]
    %v1874 = vld [vmem:[%s1869 + $0x10] sm:$0xf]
    %v1875 = vld [vmem:[%s1869 + $0x14] sm:$0xf]
    %v1876 = vld [vmem:[%s1869 + $0x18] sm:$0xf]
    %v1877 = vld [vmem:[%s1869 + $0x1c] sm:$0xf]
    %v1878 = vld [vmem:[%s1869 + $0x20] sm:$0xf]
    %v1879 = vld [vmem:[%s1869 + $0x24] sm:$0xf]
    %v1880 = vld [vmem:[%s1869 + $0x28] sm:$0xf]
    %v1881 = vld [vmem:[%s1869 + $0x2c] sm:$0xf]
    %v1882 = vld [vmem:[%s1869 + $0x30] sm:$0xf]
    %v1883 = vld [vmem:[%s1869 + $0x34] sm:$0xf]
    %v1884 = vld [vmem:[%s1869 + $0x38] sm:$0xf]
    %v1885 = vld [vmem:[%s1869 + $0x3c] sm:$0xf]
    %v1902 = vunpack.c.l.b16 %v1870
    %v1903 = vunpack.c.l.b16 %v1871
    %v1904 = vunpack.c.l.b16 %v1872
    %v1905 = vunpack.c.l.b16 %v1873
    %v1906 = vunpack.c.l.b16 %v1874
    %v1907 = vunpack.c.l.b16 %v1875
    %v1908 = vunpack.c.l.b16 %v1876
    %v1909 = vunpack.c.l.b16 %v1877
    %v1910 = vunpack.c.l.b16 %v1878
    %v1911 = vunpack.c.l.b16 %v1879
    %v1912 = vunpack.c.l.b16 %v1880
    %v1913 = vunpack.c.l.b16 %v1881
    %v1914 = vunpack.c.l.b16 %v1882
    %v1915 = vunpack.c.l.b16 %v1883
    %v1916 = vunpack.c.l.b16 %v1884
    %v1917 = vunpack.c.l.b16 %v1885
    %v1918 = vpack.c.b16 %v1903, %v1902
    %v1919 = vpack.c.b16 %v1905, %v1904
    %v1920 = vpack.c.b16 %v1907, %v1906
    %v1921 = vpack.c.b16 %v1909, %v1908
    %v1922 = vpack.c.b16 %v1911, %v1910
    %v1923 = vpack.c.b16 %v1913, %v1912
    %v1924 = vpack.c.b16 %v1915, %v1914
    %v1925 = vpack.c.b16 %v1917, %v1916
    %1934 = vmatprep.subr.bf16.mxu0 0
    %1935 = vmatpush1.bf16.msra.mxu0 %v1918
    %1936 = vmatprep.subr.bf16.mxu0 0
    %1937 = vmatpush1.bf16.msra.mxu0 %v1919
    %1938 = vmatprep.subr.bf16.mxu0 0
    %1939 = vmatpush1.bf16.msra.mxu0 %v1920
    %1940 = vmatprep.subr.bf16.mxu0 0
    %1941 = vmatpush1.bf16.msra.mxu0 %v1921
    %1942 = vmatprep.subr.bf16.mxu0 0
    %1943 = vmatpush1.bf16.msra.mxu0 %v1922
    %1944 = vmatprep.subr.bf16.mxu0 0
    %1945 = vmatpush1.bf16.msra.mxu0 %v1923
    %1946 = vmatprep.subr.bf16.mxu0 0
    %1947 = vmatpush1.bf16.msra.mxu0 %v1924
    %1948 = vmatprep.subr.bf16.mxu0 0
    %1949 = vmatpush1.bf16.msra.mxu0 %v1925
    %1950 = vmatprep.subr.bf16.mxu0 0
    %1951 = vmatpush1.bf16.msra.mxu0 0
    %1952 = vmatprep.subr.bf16.mxu0 0
    %1953 = vmatpush1.bf16.msra.mxu0 0
    %1954 = vmatprep.subr.bf16.mxu0 0
    %1955 = vmatpush1.bf16.msra.mxu0 0
    %1956 = vmatprep.subr.bf16.mxu0 0
    %1957 = vmatpush1.bf16.msra.mxu0 0
    %1958 = vmatprep.subr.bf16.mxu0 0
    %1959 = vmatpush1.bf16.msra.mxu0 0
    %1960 = vmatprep.subr.bf16.mxu0 0
    %1961 = vmatpush1.bf16.msra.mxu0 0
    %1962 = vmatprep.subr.bf16.mxu0 0
    %1963 = vmatpush1.bf16.msra.mxu0 0
    %1964 = vmatprep.subr.bf16.mxu0 0
    %1965 = vmatpush1.bf16.msra.mxu0 0
    %1966 = vmatprep.mubr.bf16.mxu0 0
    %1967 = vmatmul.mubr.bf16.gmra.mrb[0].mxu0 %v1867
    %v1968 = vpop.f32.mrb[0].mxu0
    %v1969 = vadd.f32 0.0, %v1968
    %v1970 = vpop.f32.mrb[0].mxu0
    %v1971 = vpop.f32.mrb[0].mxu0
    %v1972 = vadd.f32 0.0, %v1971
    %v1973 = vpop.f32.mrb[0].mxu0
    %1974 = vmatprep.mubr.bf16.mxu0 0
    %1975 = vmatmul.mubr.bf16.gmra.mrb[0].mxu0 %v1868
    %v1976 = vpop.f32.mrb[0].mxu0
    %v1977 = vadd.f32 0.0, %v1976
    %v1978 = vpop.f32.mrb[0].mxu0
    %v1979 = vpop.f32.mrb[0].mxu0
    %v1980 = vadd.f32 0.0, %v1979
    %v1981 = vpop.f32.mrb[0].mxu0
    %1982 = vdwg.mxu0
    %v1983 = vadd.f32 %v1857, %v1969
    %v1984 = vadd.f32 %v1858, %v1972
    %v1985 = vadd.f32 %v1859, %v1977
    %v1986 = vadd.f32 %v1860, %v1980
    %1987 = vst [vmem:[#allocation2] sm:$0xff] %v1983
    %1988 = vst [vmem:[#allocation2 + $0x8] sm:$0xff] %v1984
    %1989 = vst [vmem:[#allocation2 + $0x10] sm:$0xff] %v1985
    %1990 = vst [vmem:[#allocation2 + $0x18] sm:$0xff] %v1986
    %v1991 = vcombine.high %v53, %v53
    %v1992 = vcombine.high %v60, %v60
    %v1993 = vrot.slane %v53, 5
    %v1994 = vrot.slane %v1993, 4
    %v1995 = vrot.slane %v1991, 5
    %v1996 = vsel %vm218, %v1994, %v1995
    %v1997 = vrot.slane %v60, 5
    %v1998 = vrot.slane %v1997, 4
    %v1999 = vrot.slane %v1992, 5
    %v2000 = vsel %vm218, %v1998, %v1999
    %v2001 = vld [vmem:[#allocation2] sm:$0xff]
    %v2002 = vld [vmem:[#allocation2 + $0x8] sm:$0xff]
    %v2003 = vld [vmem:[#allocation2 + $0x10] sm:$0xff]
    %v2004 = vld [vmem:[#allocation2 + $0x18] sm:$0xff]
    %v2005 = vcombine.low %v1440, %v1996
    %v2006 = vcombine.low %v1444, %v2000
    %v2009 = vpack.c.bf16 %v2005, %v882
    %v2010 = vpack.c.bf16 %v2006, %v884
    %s2011 = scalar_lea.vmem [#allocation3], 832
    %v2012 = vld [vmem:[%s2011] sm:$0xf]
    %v2013 = vld [vmem:[%s2011 + $0x4] sm:$0xf]
    %v2014 = vld [vmem:[%s2011 + $0x8] sm:$0xf]
    %v2015 = vld [vmem:[%s2011 + $0xc] sm:$0xf]
    %v2016 = vld [vmem:[%s2011 + $0x10] sm:$0xf]
    %v2017 = vld [vmem:[%s2011 + $0x14] sm:$0xf]
    %v2018 = vld [vmem:[%s2011 + $0x18] sm:$0xf]
    %v2019 = vld [vmem:[%s2011 + $0x1c] sm:$0xf]
    %v2020 = vld [vmem:[%s2011 + $0x20] sm:$0xf]
    %v2021 = vld [vmem:[%s2011 + $0x24] sm:$0xf]
    %v2022 = vld [vmem:[%s2011 + $0x28] sm:$0xf]
    %v2023 = vld [vmem:[%s2011 + $0x2c] sm:$0xf]
    %v2024 = vld [vmem:[%s2011 + $0x30] sm:$0xf]
    %v2025 = vld [vmem:[%s2011 + $0x34] sm:$0xf]
    %v2026 = vld [vmem:[%s2011 + $0x38] sm:$0xf]
    %v2027 = vld [vmem:[%s2011 + $0x3c] sm:$0xf]
    %v2044 = vunpack.c.l.b16 %v2012
    %v2045 = vunpack.c.l.b16 %v2013
    %v2046 = vunpack.c.l.b16 %v2014
    %v2047 = vunpack.c.l.b16 %v2015
    %v2048 = vunpack.c.l.b16 %v2016
    %v2049 = vunpack.c.l.b16 %v2017
    %v2050 = vunpack.c.l.b16 %v2018
    %v2051 = vunpack.c.l.b16 %v2019
    %v2052 = vunpack.c.l.b16 %v2020
    %v2053 = vunpack.c.l.b16 %v2021
    %v2054 = vunpack.c.l.b16 %v2022
    %v2055 = vunpack.c.l.b16 %v2023
    %v2056 = vunpack.c.l.b16 %v2024
    %v2057 = vunpack.c.l.b16 %v2025
    %v2058 = vunpack.c.l.b16 %v2026
    %v2059 = vunpack.c.l.b16 %v2027
    %v2060 = vpack.c.b16 %v2045, %v2044
    %v2061 = vpack.c.b16 %v2047, %v2046
    %v2062 = vpack.c.b16 %v2049, %v2048
    %v2063 = vpack.c.b16 %v2051, %v2050
    %v2064 = vpack.c.b16 %v2053, %v2052
    %v2065 = vpack.c.b16 %v2055, %v2054
    %v2066 = vpack.c.b16 %v2057, %v2056
    %v2067 = vpack.c.b16 %v2059, %v2058
    %2076 = vmatprep.subr.bf16.mxu0 0
    %2077 = vmatpush1.bf16.msra.mxu0 %v2060
    %2078 = vmatprep.subr.bf16.mxu0 0
    %2079 = vmatpush1.bf16.msra.mxu0 %v2061
    %2080 = vmatprep.subr.bf16.mxu0 0
    %2081 = vmatpush1.bf16.msra.mxu0 %v2062
    %2082 = vmatprep.subr.bf16.mxu0 0
    %2083 = vmatpush1.bf16.msra.mxu0 %v2063
    %2084 = vmatprep.subr.bf16.mxu0 0
    %2085 = vmatpush1.bf16.msra.mxu0 %v2064
    %2086 = vmatprep.subr.bf16.mxu0 0
    %2087 = vmatpush1.bf16.msra.mxu0 %v2065
    %2088 = vmatprep.subr.bf16.mxu0 0
    %2089 = vmatpush1.bf16.msra.mxu0 %v2066
    %2090 = vmatprep.subr.bf16.mxu0 0
    %2091 = vmatpush1.bf16.msra.mxu0 %v2067
    %2092 = vmatprep.subr.bf16.mxu0 0
    %2093 = vmatpush1.bf16.msra.mxu0 0
    %2094 = vmatprep.subr.bf16.mxu0 0
    %2095 = vmatpush1.bf16.msra.mxu0 0
    %2096 = vmatprep.subr.bf16.mxu0 0
    %2097 = vmatpush1.bf16.msra.mxu0 0
    %2098 = vmatprep.subr.bf16.mxu0 0
    %2099 = vmatpush1.bf16.msra.mxu0 0
    %2100 = vmatprep.subr.bf16.mxu0 0
    %2101 = vmatpush1.bf16.msra.mxu0 0
    %2102 = vmatprep.subr.bf16.mxu0 0
    %2103 = vmatpush1.bf16.msra.mxu0 0
    %2104 = vmatprep.subr.bf16.mxu0 0
    %2105 = vmatpush1.bf16.msra.mxu0 0
    %2106 = vmatprep.subr.bf16.mxu0 0
    %2107 = vmatpush1.bf16.msra.mxu0 0
    %2108 = vmatprep.mubr.bf16.mxu0 0
    %2109 = vmatmul.mubr.bf16.gmra.mrb[0].mxu0 %v2009
    %v2110 = vpop.f32.mrb[0].mxu0
    %v2111 = vadd.f32 0.0, %v2110
    %v2112 = vpop.f32.mrb[0].mxu0
    %v2113 = vpop.f32.mrb[0].mxu0
    %v2114 = vadd.f32 0.0, %v2113
    %v2115 = vpop.f32.mrb[0].mxu0
    %2116 = vmatprep.mubr.bf16.mxu0 0
    %2117 = vmatmul.mubr.bf16.gmra.mrb[0].mxu0 %v2010
    %v2118 = vpop.f32.mrb[0].mxu0
    %v2119 = vadd.f32 0.0, %v2118
    %v2120 = vpop.f32.mrb[0].mxu0
    %v2121 = vpop.f32.mrb[0].mxu0
    %v2122 = vadd.f32 0.0, %v2121
    %v2123 = vpop.f32.mrb[0].mxu0
    %2124 = vdwg.mxu0
    %v2125 = vadd.f32 %v2001, %v2111
    %v2126 = vadd.f32 %v2002, %v2114
    %v2127 = vadd.f32 %v2003, %v2119
    %v2128 = vadd.f32 %v2004, %v2122
    %2129 = vst [vmem:[#allocation2] sm:$0xff] %v2125
    %2130 = vst [vmem:[#allocation2 + $0x8] sm:$0xff] %v2126
    %2131 = vst [vmem:[#allocation2 + $0x10] sm:$0xff] %v2127
    %2132 = vst [vmem:[#allocation2 + $0x18] sm:$0xff] %v2128
    %v2133 = vrot.slane %v53, 6
    %v2134 = vrot.slane %v2133, 4
    %v2135 = vrot.slane %v1991, 6
    %v2136 = vsel %vm389, %v2134, %v2135
    %v2137 = vrot.slane %v60, 6
    %v2138 = vrot.slane %v2137, 4
    %v2139 = vrot.slane %v1992, 6
    %v2140 = vsel %vm389, %v2138, %v2139
    %v2141 = vld [vmem:[#allocation2] sm:$0xff]
    %v2142 = vld [vmem:[#allocation2 + $0x8] sm:$0xff]
    %v2143 = vld [vmem:[#allocation2 + $0x10] sm:$0xff]
    %v2144 = vld [vmem:[#allocation2 + $0x18] sm:$0xff]
    %v2145 = vcombine.low %v1580, %v2136
    %v2146 = vcombine.low %v1584, %v2140
    %v2149 = vpack.c.bf16 %v2145, %v1026
    %v2150 = vpack.c.bf16 %v2146, %v1028
    %s2151 = scalar_lea.vmem [#allocation3], 896
    %v2152 = vld [vmem:[%s2151] sm:$0xf]
    %v2153 = vld [vmem:[%s2151 + $0x4] sm:$0xf]
    %v2154 = vld [vmem:[%s2151 + $0x8] sm:$0xf]
    %v2155 = vld [vmem:[%s2151 + $0xc] sm:$0xf]
    %v2156 = vld [vmem:[%s2151 + $0x10] sm:$0xf]
    %v2157 = vld [vmem:[%s2151 + $0x14] sm:$0xf]
    %v2158 = vld [vmem:[%s2151 + $0x18] sm:$0xf]
    %v2159 = vld [vmem:[%s2151 + $0x1c] sm:$0xf]
    %v2160 = vld [vmem:[%s2151 + $0x20] sm:$0xf]
    %v2161 = vld [vmem:[%s2151 + $0x24] sm:$0xf]
    %v2162 = vld [vmem:[%s2151 + $0x28] sm:$0xf]
    %v2163 = vld [vmem:[%s2151 + $0x2c] sm:$0xf]
    %v2164 = vld [vmem:[%s2151 + $0x30] sm:$0xf]
    %v2165 = vld [vmem:[%s2151 + $0x34] sm:$0xf]
    %v2166 = vld [vmem:[%s2151 + $0x38] sm:$0xf]
    %v2167 = vld [vmem:[%s2151 + $0x3c] sm:$0xf]
    %v2184 = vunpack.c.l.b16 %v2152
    %v2185 = vunpack.c.l.b16 %v2153
    %v2186 = vunpack.c.l.b16 %v2154
    %v2187 = vunpack.c.l.b16 %v2155
    %v2188 = vunpack.c.l.b16 %v2156
    %v2189 = vunpack.c.l.b16 %v2157
    %v2190 = vunpack.c.l.b16 %v2158
    %v2191 = vunpack.c.l.b16 %v2159
    %v2192 = vunpack.c.l.b16 %v2160
    %v2193 = vunpack.c.l.b16 %v2161
    %v2194 = vunpack.c.l.b16 %v2162
    %v2195 = vunpack.c.l.b16 %v2163
    %v2196 = vunpack.c.l.b16 %v2164
    %v2197 = vunpack.c.l.b16 %v2165
    %v2198 = vunpack.c.l.b16 %v2166
    %v2199 = vunpack.c.l.b16 %v2167
    %v2200 = vpack.c.b16 %v2185, %v2184
    %v2201 = vpack.c.b16 %v2187, %v2186
    %v2202 = vpack.c.b16 %v2189, %v2188
    %v2203 = vpack.c.b16 %v2191, %v2190
    %v2204 = vpack.c.b16 %v2193, %v2192
    %v2205 = vpack.c.b16 %v2195, %v2194
    %v2206 = vpack.c.b16 %v2197, %v2196
    %v2207 = vpack.c.b16 %v2199, %v2198
    %2216 = vmatprep.subr.bf16.mxu0 0
    %2217 = vmatpush1.bf16.msra.mxu0 %v2200
    %2218 = vmatprep.subr.bf16.mxu0 0
    %2219 = vmatpush1.bf16.msra.mxu0 %v2201
    %2220 = vmatprep.subr.bf16.mxu0 0
    %2221 = vmatpush1.bf16.msra.mxu0 %v2202
    %2222 = vmatprep.subr.bf16.mxu0 0
    %2223 = vmatpush1.bf16.msra.mxu0 %v2203
    %2224 = vmatprep.subr.bf16.mxu0 0
    %2225 = vmatpush1.bf16.msra.mxu0 %v2204
    %2226 = vmatprep.subr.bf16.mxu0 0
    %2227 = vmatpush1.bf16.msra.mxu0 %v2205
    %2228 = vmatprep.subr.bf16.mxu0 0
    %2229 = vmatpush1.bf16.msra.mxu0 %v2206
    %2230 = vmatprep.subr.bf16.mxu0 0
    %2231 = vmatpush1.bf16.msra.mxu0 %v2207
    %2232 = vmatprep.subr.bf16.mxu0 0
    %2233 = vmatpush1.bf16.msra.mxu0 0
    %2234 = vmatprep.subr.bf16.mxu0 0
    %2235 = vmatpush1.bf16.msra.mxu0 0
    %2236 = vmatprep.subr.bf16.mxu0 0
    %2237 = vmatpush1.bf16.msra.mxu0 0
    %2238 = vmatprep.subr.bf16.mxu0 0
    %2239 = vmatpush1.bf16.msra.mxu0 0
    %2240 = vmatprep.subr.bf16.mxu0 0
    %2241 = vmatpush1.bf16.msra.mxu0 0
    %2242 = vmatprep.subr.bf16.mxu0 0
    %2243 = vmatpush1.bf16.msra.mxu0 0
    %2244 = vmatprep.subr.bf16.mxu0 0
    %2245 = vmatpush1.bf16.msra.mxu0 0
    %2246 = vmatprep.subr.bf16.mxu0 0
    %2247 = vmatpush1.bf16.msra.mxu0 0
    %2248 = vmatprep.mubr.bf16.mxu0 0
    %2249 = vmatmul.mubr.bf16.gmra.mrb[0].mxu0 %v2149
    %v2250 = vpop.f32.mrb[0].mxu0
    %v2251 = vadd.f32 0.0, %v2250
    %v2252 = vpop.f32.mrb[0].mxu0
    %v2253 = vpop.f32.mrb[0].mxu0
    %v2254 = vadd.f32 0.0, %v2253
    %v2255 = vpop.f32.mrb[0].mxu0
    %2256 = vmatprep.mubr.bf16.mxu0 0
    %2257 = vmatmul.mubr.bf16.gmra.mrb[0].mxu0 %v2150
    %v2258 = vpop.f32.mrb[0].mxu0
    %v2259 = vadd.f32 0.0, %v2258
    %v2260 = vpop.f32.mrb[0].mxu0
    %v2261 = vpop.f32.mrb[0].mxu0
    %v2262 = vadd.f32 0.0, %v2261
    %v2263 = vpop.f32.mrb[0].mxu0
    %2264 = vdwg.mxu0
    %v2265 = vadd.f32 %v2141, %v2251
    %v2266 = vadd.f32 %v2142, %v2254
    %v2267 = vadd.f32 %v2143, %v2259
    %v2268 = vadd.f32 %v2144, %v2262
    %2269 = vst [vmem:[#allocation2] sm:$0xff] %v2265
    %2270 = vst [vmem:[#allocation2 + $0x8] sm:$0xff] %v2266
    %2271 = vst [vmem:[#allocation2 + $0x10] sm:$0xff] %v2267
    %2272 = vst [vmem:[#allocation2 + $0x18] sm:$0xff] %v2268
    %v2273 = vrot.slane %v53, 7
    %v2274 = vrot.slane %v2273, 4
    %v2275 = vrot.slane %v1991, 7
    %v2276 = vsel %vm560, %v2274, %v2275
    %v2277 = vrot.slane %v60, 7
    %v2278 = vrot.slane %v2277, 4
    %v2279 = vrot.slane %v1992, 7
    %v2280 = vsel %vm560, %v2278, %v2279
    %v2281 = vld [vmem:[#allocation2] sm:$0xff]
    %v2282 = vld [vmem:[#allocation2 + $0x8] sm:$0xff]
    %v2283 = vld [vmem:[#allocation2 + $0x10] sm:$0xff]
    %v2284 = vld [vmem:[#allocation2 + $0x18] sm:$0xff]
    %v2285 = vcombine.low %v1720, %v2276
    %v2286 = vcombine.low %v1724, %v2280
    %v2289 = vpack.c.bf16 %v2285, %v1170
    %v2290 = vpack.c.bf16 %v2286, %v1172
    %s2291 = scalar_lea.vmem [#allocation3], 960
    %v2292 = vld [vmem:[%s2291] sm:$0xf]
    %v2293 = vld [vmem:[%s2291 + $0x4] sm:$0xf]
    %v2294 = vld [vmem:[%s2291 + $0x8] sm:$0xf]
    %v2295 = vld [vmem:[%s2291 + $0xc] sm:$0xf]
    %v2296 = vld [vmem:[%s2291 + $0x10] sm:$0xf]
    %v2297 = vld [vmem:[%s2291 + $0x14] sm:$0xf]
    %v2298 = vld [vmem:[%s2291 + $0x18] sm:$0xf]
    %v2299 = vld [vmem:[%s2291 + $0x1c] sm:$0xf]
    %v2300 = vld [vmem:[%s2291 + $0x20] sm:$0xf]
    %v2301 = vld [vmem:[%s2291 + $0x24] sm:$0xf]
    %v2302 = vld [vmem:[%s2291 + $0x28] sm:$0xf]
    %v2303 = vld [vmem:[%s2291 + $0x2c] sm:$0xf]
    %v2304 = vld [vmem:[%s2291 + $0x30] sm:$0xf]
    %v2305 = vld [vmem:[%s2291 + $0x34] sm:$0xf]
    %v2306 = vld [vmem:[%s2291 + $0x38] sm:$0xf]
    %v2307 = vld [vmem:[%s2291 + $0x3c] sm:$0xf]
    %v2324 = vunpack.c.l.b16 %v2292
    %v2325 = vunpack.c.l.b16 %v2293
    %v2326 = vunpack.c.l.b16 %v2294
    %v2327 = vunpack.c.l.b16 %v2295
    %v2328 = vunpack.c.l.b16 %v2296
    %v2329 = vunpack.c.l.b16 %v2297
    %v2330 = vunpack.c.l.b16 %v2298
    %v2331 = vunpack.c.l.b16 %v2299
    %v2332 = vunpack.c.l.b16 %v2300
    %v2333 = vunpack.c.l.b16 %v2301
    %v2334 = vunpack.c.l.b16 %v2302
    %v2335 = vunpack.c.l.b16 %v2303
    %v2336 = vunpack.c.l.b16 %v2304
    %v2337 = vunpack.c.l.b16 %v2305
    %v2338 = vunpack.c.l.b16 %v2306
    %v2339 = vunpack.c.l.b16 %v2307
    %v2340 = vpack.c.b16 %v2325, %v2324
    %v2341 = vpack.c.b16 %v2327, %v2326
    %v2342 = vpack.c.b16 %v2329, %v2328
    %v2343 = vpack.c.b16 %v2331, %v2330
    %v2344 = vpack.c.b16 %v2333, %v2332
    %v2345 = vpack.c.b16 %v2335, %v2334
    %v2346 = vpack.c.b16 %v2337, %v2336
    %v2347 = vpack.c.b16 %v2339, %v2338
    %2356 = vmatprep.subr.bf16.mxu0 0
    %2357 = vmatpush1.bf16.msra.mxu0 %v2340
    %2358 = vmatprep.subr.bf16.mxu0 0
    %2359 = vmatpush1.bf16.msra.mxu0 %v2341
    %2360 = vmatprep.subr.bf16.mxu0 0
    %2361 = vmatpush1.bf16.msra.mxu0 %v2342
    %2362 = vmatprep.subr.bf16.mxu0 0
    %2363 = vmatpush1.bf16.msra.mxu0 %v2343
    %2364 = vmatprep.subr.bf16.mxu0 0
    %2365 = vmatpush1.bf16.msra.mxu0 %v2344
    %2366 = vmatprep.subr.bf16.mxu0 0
    %2367 = vmatpush1.bf16.msra.mxu0 %v2345
    %2368 = vmatprep.subr.bf16.mxu0 0
    %2369 = vmatpush1.bf16.msra.mxu0 %v2346
    %2370 = vmatprep.subr.bf16.mxu0 0
    %2371 = vmatpush1.bf16.msra.mxu0 %v2347
    %2372 = vmatprep.subr.bf16.mxu0 0
    %2373 = vmatpush1.bf16.msra.mxu0 0
    %2374 = vmatprep.subr.bf16.mxu0 0
    %2375 = vmatpush1.bf16.msra.mxu0 0
    %2376 = vmatprep.subr.bf16.mxu0 0
    %2377 = vmatpush1.bf16.msra.mxu0 0
    %2378 = vmatprep.subr.bf16.mxu0 0
    %2379 = vmatpush1.bf16.msra.mxu0 0
    %2380 = vmatprep.subr.bf16.mxu0 0
    %2381 = vmatpush1.bf16.msra.mxu0 0
    %2382 = vmatprep.subr.bf16.mxu0 0
    %2383 = vmatpush1.bf16.msra.mxu0 0
    %2384 = vmatprep.subr.bf16.mxu0 0
    %2385 = vmatpush1.bf16.msra.mxu0 0
    %2386 = vmatprep.subr.bf16.mxu0 0
    %2387 = vmatpush1.bf16.msra.mxu0 0
    %2388 = vmatprep.mubr.bf16.mxu0 0
    %2389 = vmatmul.mubr.bf16.gmra.mrb[0].mxu0 %v2289
    %v2390 = vpop.f32.mrb[0].mxu0
    %v2391 = vadd.f32 0.0, %v2390
    %v2392 = vpop.f32.mrb[0].mxu0
    %v2393 = vpop.f32.mrb[0].mxu0
    %v2394 = vadd.f32 0.0, %v2393
    %v2395 = vpop.f32.mrb[0].mxu0
    %2396 = vmatprep.mubr.bf16.mxu0 0
    %2397 = vmatmul.mubr.bf16.gmra.mrb[0].mxu0 %v2290
    %v2398 = vpop.f32.mrb[0].mxu0
    %v2399 = vadd.f32 0.0, %v2398
    %v2400 = vpop.f32.mrb[0].mxu0
    %v2401 = vpop.f32.mrb[0].mxu0
    %v2402 = vadd.f32 0.0, %v2401
    %v2403 = vpop.f32.mrb[0].mxu0
    %2404 = vdwg.mxu0
    %v2405 = vadd.f32 %v2281, %v2391
    %v2406 = vadd.f32 %v2282, %v2394
    %v2407 = vadd.f32 %v2283, %v2399
    %v2408 = vadd.f32 %v2284, %v2402
    %2409 = vst [vmem:[#allocation2] sm:$0xff] %v2405
    %2410 = vst [vmem:[#allocation2 + $0x8] sm:$0xff] %v2406
    %2411 = vst [vmem:[#allocation2 + $0x10] sm:$0xff] %v2407
    %2412 = vst [vmem:[#allocation2 + $0x18] sm:$0xff] %v2408
    %v2413 = vld [vmem:[#allocation2] sm:$0xff]
    %v2414 = vld [vmem:[#allocation2 + $0x8] sm:$0xff]
    %v2415 = vld [vmem:[#allocation2 + $0x10] sm:$0xff]
    %v2416 = vld [vmem:[#allocation2 + $0x18] sm:$0xff]
    %v2417 = vadd.f32 %v2413, %v2414
    %v2418 = vadd.f32 %v2417, %v2415
    %v2419 = vadd.f32 %v2418, %v2416
    %v2420 = vrot.slane %v2419, 4
    %v2421 = vadd.f32 %v2419, %v2420
    %v2422 = vrot.slane %v2421, 2
    %v2423 = vadd.f32 %v2421, %v2422
    %v2424 = vrot.slane %v2423, 1
    %v2425 = vadd.f32 %v2423, %v2424
    %v2426 = vmul.f32 %v2425, 0.03125
    %v2427 = vmul.f32 %v2413, %v2413
    %v2428 = vmul.f32 %v2414, %v2414
    %v2429 = vmul.f32 %v2415, %v2415
    %v2430 = vmul.f32 %v2416, %v2416
    %v2431 = vadd.f32 %v2427, %v2428
    %v2432 = vadd.f32 %v2431, %v2429
    %v2433 = vadd.f32 %v2432, %v2430
    %v2434 = vrot.slane %v2433, 4
    %v2435 = vadd.f32 %v2433, %v2434
    %v2436 = vrot.slane %v2435, 2
    %v2437 = vadd.f32 %v2435, %v2436
    %v2438 = vrot.slane %v2437, 1
    %v2439 = vadd.f32 %v2437, %v2438
    %v2440 = vmul.f32 %v2439, 0.03125
    %v2441 = vmul.f32 %v2426, %v2426
    %v2442 = vsub.f32 %v2440, %v2441
    %v2443 = vadd.f32 %v2442, 1e-05
    %v2444 = vrsqrt.pop %v2443
    %v2445 = vld [vmem:[%s2] sm:$0x1]
    %v2446 = vmul.f32 %v2444, %v2445
    %v2447 = vld [vmem:[%s3] sm:$0x1]
    %v2448 = vmul.f32 %v2426, %v2446
    %v2449 = vsub.f32 %v2447, %v2448
    %v2450 = vlaneseq
    %v2451 = vshrl.u32 %v2450, 7
    %v2452 = vsub.s32 0, %v2451
    %v2453 = vrot.slane %v2446, %v2452
    %v2454 = vmul.f32 %v2413, %v2453
    %v2455 = vmul.f32 %v2414, %v2453
    %v2456 = vmul.f32 %v2415, %v2453
    %v2457 = vmul.f32 %v2416, %v2453
    %v2459 = vlaneseq
    %v2460 = vshrl.u32 %v2459, 7
    %v2461 = vsub.s32 0, %v2460
    %v2462 = vrot.slane %v2449, %v2461
    %v2464 = vadd.f32 %v2454, %v2462
    %v2465 = vadd.f32 %v2455, %v2462
    %v2466 = vadd.f32 %v2456, %v2462
    %v2467 = vadd.f32 %v2457, %v2462
    %v2468 = vmax.f32 %v2464, 0.0
    %v2469 = vmax.f32 %v2465, 0.0
    %v2470 = vmax.f32 %v2466, 0.0
    %v2471 = vmax.f32 %v2467, 0.0
    %v2476 = vcombine.high %v2468, %v2468
    %v2477 = vcombine.high %v2469, %v2469
    %v2478 = vcombine.high %v2470, %v2470
    %v2479 = vcombine.high %v2471, %v2471
    %v2484 = vpack.c.bf16 %v2468, %v2468
    %v2485 = vpack.c.bf16 %v2476, %v2476
    %v2486 = vpack.c.bf16 %v2469, %v2469
    %v2487 = vpack.c.bf16 %v2477, %v2477
    %v2488 = vpack.c.bf16 %v2470, %v2470
    %v2489 = vpack.c.bf16 %v2478, %v2478
    %v2490 = vpack.c.bf16 %v2471, %v2471
    %v2491 = vpack.c.bf16 %v2479, %v2479
    %2492 = vst [vmem:[#allocation6] sm:$0x3] %v2484
    %2493 = vst [vmem:[#allocation6 + $0x2] sm:$0x3] %v2485
    %2494 = vst [vmem:[#allocation6 + $0x4] sm:$0x3] %v2486
    %2495 = vst [vmem:[#allocation6 + $0x6] sm:$0x3] %v2487
    %2496 = vst [vmem:[#allocation6 + $0x8] sm:$0x3] %v2488
    %2497 = vst [vmem:[#allocation6 + $0xa] sm:$0x3] %v2489
    %2498 = vst [vmem:[#allocation6 + $0xc] sm:$0x3] %v2490
    %2499 = vst [vmem:[#allocation6 + $0xe] sm:$0x3] %v2491
    // Predicated region
    $region22: #{tpu_custom_call.1} parent=1 // pred_check
      _
    $region23: #{tpu_custom_call.1} parent=1 // pred_check_branch
      %2501 = sbr.rel (0) target = $region25
    $region24: #{tpu_custom_call.1} parent=1 // pred_region
      %s2503 = ssub.s32 256, 256
      %2504 = vsyncadd [#allocation5], %s2503
      %s2505 = sshll.u32 [#allocation6], 4
      %s2506 = int_to_ptr.vmem [resolvable:$true] %s2505
      %2511 = dma.vmem_to_hbm [thread:$0]  %s2506, 256, %s4, [#allocation5], 32, 32, 2
    $region25: #{tpu_custom_call.1} parent=1 // pred_fallthru
      _
    // Predicated region
    $region26: #{tpu_custom_call.1} parent=1 // pred_check
      _
    $region27: #{tpu_custom_call.1} parent=1 // pred_check_branch
      %2513 = sbr.rel (0) target = $region29
    $region28: #{tpu_custom_call.1} parent=1 // pred_region
      %2514 = dma.done [#allocation5], 256
    $region29: #{tpu_custom_call.1} parent=1 // pred_fallthru
      _
    %2515 = vsyncpa [#allocation4], 1
    %2516 = vsyncpa [#allocation5], 1

</llo_original>
